<compile_context>
chip_gen: v6e
topology: v6e:2x2x1
jax: 0.10.0
libtpu: 0.0.40
codegen_flags: <defaults>
</compile_context>

<pallas_src>
import math

import jax
import jax.numpy as jnp
import numpy as np
from jax.experimental import pallas as pl
from jax.experimental.pallas import tpu as pltpu

_TAPS = [(ky - 1, kx - 1) for ky in range(3) for kx in range(3)]


def _grid_split(B):
    """2-wide parallel grid when possible (feeds both TCs on v7x)."""
    n_blocks = 2 if (B % 2 == 0 and B >= 2) else 1
    return n_blocks, B // n_blocks


def make_masks(H, W, G):
    """(9, G*H*W) f32 validity masks for the 3x3 SAME zero padding, tiled per image."""
    HW = H * W
    py, px = np.divmod(np.arange(HW), W)
    rows = []
    for dy, dx in _TAPS:
        ok = (py + dy >= 0) & (py + dy < H) & (px + dx >= 0) & (px + dx < W)
        rows.append(ok)
    m = np.stack(rows).astype(np.float32)          # (9, HW)
    return np.tile(m, (1, G))                      # (9, G*HW)


def pack_params(params):
    """One-time repack of PyTorch-layout params into the fused kernel layout."""
    # conv W (O, C, ky, kx) -> fused (O, K) with K ordered tap-major, channel-minor,
    # matching the stacked inputs built in the kernel (row = tap*Cin + c).
    w1f = jnp.transpose(params["conv1_w"], (0, 2, 3, 1)).reshape(16, 27)
    w2f = jnp.transpose(params["conv2_w"], (0, 2, 3, 1)).reshape(3, 144)
    return {
        "w1f": w1f.astype(jnp.float32),
        "b1": params["conv1_b"].reshape(16, 1).astype(jnp.float32),
        "w2f": w2f.astype(jnp.float32),
        "b2": params["conv2_b"].reshape(3, 1).astype(jnp.float32),
        "lin_w": params["lin_w"].astype(jnp.float32),   # (16, 1)
        "lin_b": params["lin_b"].astype(jnp.float32),   # (16,)
    }


def _make_kernel(H, W, G):
    HW = H * W
    LANES = G * HW
    # shifted[p] = src[p + dy*W + dx]  ==  roll(src, shift=-(dy*W+dx))
    shifts = [(-(dy * W + dx)) % LANES for dy, dx in _TAPS]

    def kernel(x_ref, temb_ref, masks_ref, w1_ref, b1_ref, w2_ref, b2_ref,
               o_ref, s1_ref):
        # ---- gather the G images of this block into one lane-dense slab ----
        if G > 1:
            # lane concat at HW-aligned (multiple of 128) offsets: vreg placement only
            x = jnp.concatenate([x_ref[g] for g in range(G)], axis=1)   # (3, LANES)
        else:
            x = x_ref[0]                                                # (3, LANES)
        masks = masks_ref[...]                                          # (9, LANES)

        # ---- conv1 (3 -> 16, 3x3 SAME): stack 9 masked/rolled taps along K,
        #      one fused MXU matmul with K = 27 ----
        for i in range(9):
            if shifts[i] == 0:
                slab = x                                 # center tap: no roll/mask
            else:
                slab = pltpu.roll(x, shift=shifts[i], axis=1) * masks[i:i + 1]
            s1_ref[pl.ds(3 * i, 3), :] = slab            # (3, LANES) -> rows [3i, 3i+3)
        h = jnp.dot(w1_ref[...], s1_ref[...],
                    preferred_element_type=jnp.float32)  # (16, LANES)
        h = jnp.maximum(h + b1_ref[...], 0.0)            # bias + ReLU
        h = h + temb_ref[...]                            # + Linear(t), pre-broadcast

        # ---- conv2 (16 -> 3, 3x3 SAME): pre-mask rolled h (equivalent to
        #      post-mask for zero padding), stack K = 144, one MXU matmul ----
        slabs = []
        for i in range(9):
            if shifts[i] == 0:
                slabs.append(h)
            else:
                slabs.append(pltpu.roll(h, shift=shifts[i], axis=1) * masks[i:i + 1])
        s2 = jnp.concatenate(slabs, axis=0)              # (144, LANES), 16-row aligned
        out = jnp.dot(w2_ref[...], s2,
                      preferred_element_type=jnp.float32) + b2_ref[...]   # (3, LANES)

        # ---- scatter back per image (static lane slices at HW-aligned offsets) ----
        for g in range(G):
            o_ref[g] = out[:, g * HW:(g + 1) * HW]       # (3, HW), NCHW layout

    return kernel


@jax.jit
def model_forward(packed, masks, x_nchw, t):
    """x_nchw: [B, 3, H, W] (PyTorch layout); t: [B, 1] (real or int dtype)."""
    B, C, H, W = x_nchw.shape
    assert C == 3
    HW = H * W
    n_blocks, G = _grid_split(B)
    LANES = G * HW
    assert masks.shape == (9, LANES)

    x2 = x_nchw.astype(jnp.float32).reshape(B, 3, HW)    # contiguous reshape only

    # Time embedding computed in the wrapper: (B,1)@(1,16)+(16,) -> (B,16),
    # then pre-broadcast to the kernel's lane layout (image-major lanes).
    temb = t.astype(jnp.float32) @ packed["lin_w"].T + packed["lin_b"]   # (B, 16)
    temb_b = jnp.broadcast_to(temb.T[:, :, None], (16, B, HW)).reshape(16, B * HW)

    kernel = _make_kernel(H, W, G)
    out = pl.pallas_call(
        kernel,
        out_shape=jax.ShapeDtypeStruct((B, 3, HW), jnp.float32),
        grid_spec=pltpu.PrefetchScalarGridSpec(
            num_scalar_prefetch=0,
            grid=(n_blocks,),
            in_specs=[
                pl.BlockSpec((G, 3, HW), lambda g: (g, 0, 0)),      # x, G images/step
                pl.BlockSpec((16, LANES), lambda g: (0, g)),        # temb (pre-broadcast)
                pl.BlockSpec((9, LANES), lambda g: (0, 0)),         # edge masks (resident)
                pl.BlockSpec((16, 27), lambda g: (0, 0)),           # conv1 W fused (resident)
                pl.BlockSpec((16, 1), lambda g: (0, 0)),            # conv1 b
                pl.BlockSpec((3, 144), lambda g: (0, 0)),           # conv2 W fused (resident)
                pl.BlockSpec((3, 1), lambda g: (0, 0)),             # conv2 b
            ],
            out_specs=pl.BlockSpec((G, 3, HW), lambda g: (g, 0, 0)),  # NCHW, lane-dense
            scratch_shapes=[pltpu.VMEM((27, LANES), jnp.float32)],    # conv1 K-stack
        ),
        compiler_params=pltpu.CompilerParams(
            dimension_semantics=("parallel",)),
    )(x2, temb_b, masks, packed["w1f"], packed["b1"],
      packed["w2f"], packed["b2"])

    return out.reshape(B, 3, H, W)   # already channels-first; pure reshape


def init_params(key):
    """Deterministic PyTorch-default-style init (uniform +/- 1/sqrt(fan_in))."""
    k1, k2, k3, k4, k5, k6 = jax.random.split(key, 6)

    def u(k, shape, bound):
        return jax.random.uniform(k, shape, jnp.float32, -bound, bound)

    bc1 = 1.0 / math.sqrt(3 * 3 * 3)
    bc2 = 1.0 / math.sqrt(16 * 3 * 3)
    blin = 1.0  # fan_in = 1
    return {
        "conv1_w": u(k1, (16, 3, 3, 3), bc1),
        "conv1_b": u(k2, (16,), bc1),
        "conv2_w": u(k3, (3, 16, 3, 3), bc2),
        "conv2_b": u(k4, (3,), bc2),
        "lin_w": u(k5, (16, 1), blin),
        "lin_b": u(k6, (16,), blin),
    }


def ref_forward(params, x_nchw, t):
    """Pure-JAX reference matching the PyTorch forward (for verification)."""
    dn = ("NCHW", "OIHW", "NCHW")
    h = jax.lax.conv_general_dilated(
        x_nchw.astype(jnp.float32), params["conv1_w"], (1, 1), "SAME",
        dimension_numbers=dn) + params["conv1_b"].reshape(1, -1, 1, 1)
    h = jax.nn.relu(h)
    temb = t.astype(jnp.float32) @ params["lin_w"].T + params["lin_b"]
    h = h + temb.reshape(-1, 16, 1, 1)
    out = jax.lax.conv_general_dilated(
        h, params["conv2_w"], (1, 1), "SAME",
        dimension_numbers=dn) + params["conv2_b"].reshape(1, -1, 1, 1)
    return out


if __name__ == "__main__":
    key = jax.random.PRNGKey(0)
    kp, kx, kt = jax.random.split(key, 3)

    params = init_params(kp)
    packed = pack_params(params)            # weight packing hoisted out of forward

    B, H, W = 4, 16, 16
    n_blocks, G = _grid_split(B)
    masks = jnp.asarray(make_masks(H, W, G))           # resident edge masks

    x = jax.random.normal(kx, (B, 3, H, W), jnp.float32)   # NCHW, like PyTorch
    t = jax.random.randint(kt, (B, 1), 0, 1000)            # integer timesteps

    out = jax.block_until_ready(model_forward(packed, masks, x, t))
    ref = jax.block_until_ready(ref_forward(params, x, t))
    np.testing.assert_allclose(np.asarray(out), np.asarray(ref),
                               rtol=1e-4, atol=1e-3)
    print("KERNEL_OK")
</pallas_src>

<mosaic_0001>
module attributes {stable_mosaic.version = 11 : i64} {
  func.func @kernel(%arg0: i32, %arg1: memref<2x3x256xf32, #tpu.memory_space<vmem>>, %arg2: memref<16x512xf32, #tpu.memory_space<vmem>>, %arg3: memref<9x512xf32, #tpu.memory_space<vmem>>, %arg4: memref<16x27xf32, #tpu.memory_space<vmem>>, %arg5: memref<16x1xf32, #tpu.memory_space<vmem>>, %arg6: memref<3x144xf32, #tpu.memory_space<vmem>>, %arg7: memref<3x1xf32, #tpu.memory_space<vmem>>, %arg8: memref<2x3x256xf32, #tpu.memory_space<vmem>>, %arg9: memref<27x512xf32, #tpu.memory_space<vmem>>) attributes {dimension_semantics = [#tpu.dimension_semantics<parallel>], iteration_bounds = array<i64: 2>, scalar_prefetch = 0 : i64, scratch_operands = 1 : i64, tpu.core_type = #tpu.core_type<tc>, window_params = [{transform_indices = @transform_0, window_bounds = array<i64: 2, 3, 256>}, {transform_indices = @transform_1, window_bounds = array<i64: 16, 512>}, {pipeline_mode = #tpu.pipeline_mode<synchronous>, transform_indices = @transform_2, window_bounds = array<i64: 9, 512>}, {pipeline_mode = #tpu.pipeline_mode<synchronous>, transform_indices = @transform_3, window_bounds = array<i64: 16, 27>}, {pipeline_mode = #tpu.pipeline_mode<synchronous>, transform_indices = @transform_4, window_bounds = array<i64: 16, 1>}, {pipeline_mode = #tpu.pipeline_mode<synchronous>, transform_indices = @transform_5, window_bounds = array<i64: 3, 144>}, {pipeline_mode = #tpu.pipeline_mode<synchronous>, transform_indices = @transform_6, window_bounds = array<i64: 3, 1>}, {transform_indices = @transform_7, window_bounds = array<i64: 2, 3, 256>}]} {
    %c0 = arith.constant 0 : index
    %c0_0 = arith.constant 0 : index
    %c0_1 = arith.constant 0 : index
    %0 = vector.load %arg1[%c0, %c0_0, %c0_1] : memref<2x3x256xf32, #tpu.memory_space<vmem>>, vector<1x3x256xf32>
    %1 = vector.shape_cast %0 : vector<1x3x256xf32> to vector<3x256xf32>
    %c1 = arith.constant 1 : index
    %c0_2 = arith.constant 0 : index
    %c0_3 = arith.constant 0 : index
    %2 = vector.load %arg1[%c1, %c0_2, %c0_3] : memref<2x3x256xf32, #tpu.memory_space<vmem>>, vector<1x3x256xf32>
    %3 = vector.shape_cast %2 : vector<1x3x256xf32> to vector<3x256xf32>
    %4 = tpu.concatenate %1, %3 in 1 : vector<3x256xf32>, vector<3x256xf32> -> vector<3x512xf32>
    %c0_4 = arith.constant 0 : index
    %c0_5 = arith.constant 0 : index
    %5 = vector.load %arg3[%c0_4, %c0_5] : memref<9x512xf32, #tpu.memory_space<vmem>>, vector<9x512xf32>
    %c17_i32 = arith.constant 17 : i32
    %6 = tpu.dynamic_rotate %4 by %c17_i32 dim 1 : vector<3x512xf32>, i32 -> vector<3x512xf32>
    %7 = vector.extract_strided_slice %5 {offsets = [0, 0], sizes = [1, 512], strides = [1, 1]} : vector<9x512xf32> to vector<1x512xf32>
    %8 = vector.broadcast %7 : vector<1x512xf32> to vector<3x512xf32>
    %9 = arith.mulf %6, %8 : vector<3x512xf32>
    %c0_6 = arith.constant 0 : index
    %c0_7 = arith.constant 0 : index
    %10 = vector.load %arg9[%c0_6, %c0_7] : memref<27x512xf32, #tpu.memory_space<vmem>>, vector<3x512xf32>
    tpu.vector_store %arg9[%c0_6, %c0_7], %9 {strides = array<i32>} : memref<27x512xf32, #tpu.memory_space<vmem>>, vector<3x512xf32>,
    %c16_i32 = arith.constant 16 : i32
    %11 = tpu.dynamic_rotate %4 by %c16_i32 dim 1 : vector<3x512xf32>, i32 -> vector<3x512xf32>
    %12 = vector.extract_strided_slice %5 {offsets = [1, 0], sizes = [1, 512], strides = [1, 1]} : vector<9x512xf32> to vector<1x512xf32>
    %13 = vector.broadcast %12 : vector<1x512xf32> to vector<3x512xf32>
    %14 = arith.mulf %11, %13 : vector<3x512xf32>
    %c3 = arith.constant 3 : index
    %c0_8 = arith.constant 0 : index
    %15 = vector.load %arg9[%c3, %c0_8] : memref<27x512xf32, #tpu.memory_space<vmem>>, vector<3x512xf32>
    tpu.vector_store %arg9[%c3, %c0_8], %14 {strides = array<i32>} : memref<27x512xf32, #tpu.memory_space<vmem>>, vector<3x512xf32>,
    %c15_i32 = arith.constant 15 : i32
    %16 = tpu.dynamic_rotate %4 by %c15_i32 dim 1 : vector<3x512xf32>, i32 -> vector<3x512xf32>
    %17 = vector.extract_strided_slice %5 {offsets = [2, 0], sizes = [1, 512], strides = [1, 1]} : vector<9x512xf32> to vector<1x512xf32>
    %18 = vector.broadcast %17 : vector<1x512xf32> to vector<3x512xf32>
    %19 = arith.mulf %16, %18 : vector<3x512xf32>
    %c6 = arith.constant 6 : index
    %c0_9 = arith.constant 0 : index
    %20 = vector.load %arg9[%c6, %c0_9] : memref<27x512xf32, #tpu.memory_space<vmem>>, vector<3x512xf32>
    tpu.vector_store %arg9[%c6, %c0_9], %19 {strides = array<i32>} : memref<27x512xf32, #tpu.memory_space<vmem>>, vector<3x512xf32>,
    %c1_i32 = arith.constant 1 : i32
    %21 = tpu.dynamic_rotate %4 by %c1_i32 dim 1 : vector<3x512xf32>, i32 -> vector<3x512xf32>
    %22 = vector.extract_strided_slice %5 {offsets = [3, 0], sizes = [1, 512], strides = [1, 1]} : vector<9x512xf32> to vector<1x512xf32>
    %23 = vector.broadcast %22 : vector<1x512xf32> to vector<3x512xf32>
    %24 = arith.mulf %21, %23 : vector<3x512xf32>
    %c9 = arith.constant 9 : index
    %c0_10 = arith.constant 0 : index
    %25 = vector.load %arg9[%c9, %c0_10] : memref<27x512xf32, #tpu.memory_space<vmem>>, vector<3x512xf32>
    tpu.vector_store %arg9[%c9, %c0_10], %24 {strides = array<i32>} : memref<27x512xf32, #tpu.memory_space<vmem>>, vector<3x512xf32>,
    %c12 = arith.constant 12 : index
    %c0_11 = arith.constant 0 : index
    %26 = vector.load %arg9[%c12, %c0_11] : memref<27x512xf32, #tpu.memory_space<vmem>>, vector<3x512xf32>
    tpu.vector_store %arg9[%c12, %c0_11], %4 {strides = array<i32>} : memref<27x512xf32, #tpu.memory_space<vmem>>, vector<3x512xf32>,
    %c511_i32 = arith.constant 511 : i32
    %27 = tpu.dynamic_rotate %4 by %c511_i32 dim 1 : vector<3x512xf32>, i32 -> vector<3x512xf32>
    %28 = vector.extract_strided_slice %5 {offsets = [5, 0], sizes = [1, 512], strides = [1, 1]} : vector<9x512xf32> to vector<1x512xf32>
    %29 = vector.broadcast %28 : vector<1x512xf32> to vector<3x512xf32>
    %30 = arith.mulf %27, %29 : vector<3x512xf32>
    %c15 = arith.constant 15 : index
    %c0_12 = arith.constant 0 : index
    %31 = vector.load %arg9[%c15, %c0_12] : memref<27x512xf32, #tpu.memory_space<vmem>>, vector<3x512xf32>
    tpu.vector_store %arg9[%c15, %c0_12], %30 {strides = array<i32>} : memref<27x512xf32, #tpu.memory_space<vmem>>, vector<3x512xf32>,
    %c497_i32 = arith.constant 497 : i32
    %32 = tpu.dynamic_rotate %4 by %c497_i32 dim 1 : vector<3x512xf32>, i32 -> vector<3x512xf32>
    %33 = vector.extract_strided_slice %5 {offsets = [6, 0], sizes = [1, 512], strides = [1, 1]} : vector<9x512xf32> to vector<1x512xf32>
    %34 = vector.broadcast %33 : vector<1x512xf32> to vector<3x512xf32>
    %35 = arith.mulf %32, %34 : vector<3x512xf32>
    %c18 = arith.constant 18 : index
    %c0_13 = arith.constant 0 : index
    %36 = vector.load %arg9[%c18, %c0_13] : memref<27x512xf32, #tpu.memory_space<vmem>>, vector<3x512xf32>
    tpu.vector_store %arg9[%c18, %c0_13], %35 {strides = array<i32>} : memref<27x512xf32, #tpu.memory_space<vmem>>, vector<3x512xf32>,
    %c496_i32 = arith.constant 496 : i32
    %37 = tpu.dynamic_rotate %4 by %c496_i32 dim 1 : vector<3x512xf32>, i32 -> vector<3x512xf32>
    %38 = vector.extract_strided_slice %5 {offsets = [7, 0], sizes = [1, 512], strides = [1, 1]} : vector<9x512xf32> to vector<1x512xf32>
    %39 = vector.broadcast %38 : vector<1x512xf32> to vector<3x512xf32>
    %40 = arith.mulf %37, %39 : vector<3x512xf32>
    %c21 = arith.constant 21 : index
    %c0_14 = arith.constant 0 : index
    %41 = vector.load %arg9[%c21, %c0_14] : memref<27x512xf32, #tpu.memory_space<vmem>>, vector<3x512xf32>
    tpu.vector_store %arg9[%c21, %c0_14], %40 {strides = array<i32>} : memref<27x512xf32, #tpu.memory_space<vmem>>, vector<3x512xf32>,
    %c495_i32 = arith.constant 495 : i32
    %42 = tpu.dynamic_rotate %4 by %c495_i32 dim 1 : vector<3x512xf32>, i32 -> vector<3x512xf32>
    %43 = vector.extract_strided_slice %5 {offsets = [8, 0], sizes = [1, 512], strides = [1, 1]} : vector<9x512xf32> to vector<1x512xf32>
    %44 = vector.broadcast %43 : vector<1x512xf32> to vector<3x512xf32>
    %45 = arith.mulf %42, %44 : vector<3x512xf32>
    %c24 = arith.constant 24 : index
    %c0_15 = arith.constant 0 : index
    %46 = vector.load %arg9[%c24, %c0_15] : memref<27x512xf32, #tpu.memory_space<vmem>>, vector<3x512xf32>
    tpu.vector_store %arg9[%c24, %c0_15], %45 {strides = array<i32>} : memref<27x512xf32, #tpu.memory_space<vmem>>, vector<3x512xf32>,
    %c0_16 = arith.constant 0 : index
    %c0_17 = arith.constant 0 : index
    %47 = vector.load %arg4[%c0_16, %c0_17] : memref<16x27xf32, #tpu.memory_space<vmem>>, vector<16x27xf32>
    %c0_18 = arith.constant 0 : index
    %c0_19 = arith.constant 0 : index
    %48 = vector.load %arg9[%c0_18, %c0_19] : memref<27x512xf32, #tpu.memory_space<vmem>>, vector<27x512xf32>
    %cst = arith.constant dense<0.000000e+00> : vector<16x512xf32>
    %49 = tpu.matmul %47, %48, %cst {dimension_numbers = #tpu.dot_dimension_numbers<[1], [0], [0], [1], [0, 0, 1, 1], [], []>} : vector<16x27xf32>, vector<27x512xf32>, vector<16x512xf32> -> vector<16x512xf32>
    %c0_20 = arith.constant 0 : index
    %c0_21 = arith.constant 0 : index
    %50 = vector.load %arg5[%c0_20, %c0_21] : memref<16x1xf32, #tpu.memory_space<vmem>>, vector<16x1xf32>
    %51 = vector.broadcast %50 : vector<16x1xf32> to vector<16x512xf32>
    %52 = arith.addf %49, %51 : vector<16x512xf32>
    %cst_22 = arith.constant 0.000000e+00 : f32
    %53 = vector.broadcast %cst_22 : f32 to vector<16x512xf32>
    %54 = arith.maximumf %52, %53 : vector<16x512xf32>
    %c0_23 = arith.constant 0 : index
    %c0_24 = arith.constant 0 : index
    %55 = vector.load %arg2[%c0_23, %c0_24] : memref<16x512xf32, #tpu.memory_space<vmem>>, vector<16x512xf32>
    %56 = arith.addf %54, %55 : vector<16x512xf32>
    %c17_i32_25 = arith.constant 17 : i32
    %57 = tpu.dynamic_rotate %56 by %c17_i32_25 dim 1 : vector<16x512xf32>, i32 -> vector<16x512xf32>
    %58 = vector.extract_strided_slice %5 {offsets = [0, 0], sizes = [1, 512], strides = [1, 1]} : vector<9x512xf32> to vector<1x512xf32>
    %59 = vector.broadcast %58 : vector<1x512xf32> to vector<16x512xf32>
    %60 = arith.mulf %57, %59 : vector<16x512xf32>
    %c16_i32_26 = arith.constant 16 : i32
    %61 = tpu.dynamic_rotate %56 by %c16_i32_26 dim 1 : vector<16x512xf32>, i32 -> vector<16x512xf32>
    %62 = vector.extract_strided_slice %5 {offsets = [1, 0], sizes = [1, 512], strides = [1, 1]} : vector<9x512xf32> to vector<1x512xf32>
    %63 = vector.broadcast %62 : vector<1x512xf32> to vector<16x512xf32>
    %64 = arith.mulf %61, %63 : vector<16x512xf32>
    %c15_i32_27 = arith.constant 15 : i32
    %65 = tpu.dynamic_rotate %56 by %c15_i32_27 dim 1 : vector<16x512xf32>, i32 -> vector<16x512xf32>
    %66 = vector.extract_strided_slice %5 {offsets = [2, 0], sizes = [1, 512], strides = [1, 1]} : vector<9x512xf32> to vector<1x512xf32>
    %67 = vector.broadcast %66 : vector<1x512xf32> to vector<16x512xf32>
    %68 = arith.mulf %65, %67 : vector<16x512xf32>
    %c1_i32_28 = arith.constant 1 : i32
    %69 = tpu.dynamic_rotate %56 by %c1_i32_28 dim 1 : vector<16x512xf32>, i32 -> vector<16x512xf32>
    %70 = vector.extract_strided_slice %5 {offsets = [3, 0], sizes = [1, 512], strides = [1, 1]} : vector<9x512xf32> to vector<1x512xf32>
    %71 = vector.broadcast %70 : vector<1x512xf32> to vector<16x512xf32>
    %72 = arith.mulf %69, %71 : vector<16x512xf32>
    %c511_i32_29 = arith.constant 511 : i32
    %73 = tpu.dynamic_rotate %56 by %c511_i32_29 dim 1 : vector<16x512xf32>, i32 -> vector<16x512xf32>
    %74 = vector.extract_strided_slice %5 {offsets = [5, 0], sizes = [1, 512], strides = [1, 1]} : vector<9x512xf32> to vector<1x512xf32>
    %75 = vector.broadcast %74 : vector<1x512xf32> to vector<16x512xf32>
    %76 = arith.mulf %73, %75 : vector<16x512xf32>
    %c497_i32_30 = arith.constant 497 : i32
    %77 = tpu.dynamic_rotate %56 by %c497_i32_30 dim 1 : vector<16x512xf32>, i32 -> vector<16x512xf32>
    %78 = vector.extract_strided_slice %5 {offsets = [6, 0], sizes = [1, 512], strides = [1, 1]} : vector<9x512xf32> to vector<1x512xf32>
    %79 = vector.broadcast %78 : vector<1x512xf32> to vector<16x512xf32>
    %80 = arith.mulf %77, %79 : vector<16x512xf32>
    %c496_i32_31 = arith.constant 496 : i32
    %81 = tpu.dynamic_rotate %56 by %c496_i32_31 dim 1 : vector<16x512xf32>, i32 -> vector<16x512xf32>
    %82 = vector.extract_strided_slice %5 {offsets = [7, 0], sizes = [1, 512], strides = [1, 1]} : vector<9x512xf32> to vector<1x512xf32>
    %83 = vector.broadcast %82 : vector<1x512xf32> to vector<16x512xf32>
    %84 = arith.mulf %81, %83 : vector<16x512xf32>
    %c495_i32_32 = arith.constant 495 : i32
    %85 = tpu.dynamic_rotate %56 by %c495_i32_32 dim 1 : vector<16x512xf32>, i32 -> vector<16x512xf32>
    %86 = vector.extract_strided_slice %5 {offsets = [8, 0], sizes = [1, 512], strides = [1, 1]} : vector<9x512xf32> to vector<1x512xf32>
    %87 = vector.broadcast %86 : vector<1x512xf32> to vector<16x512xf32>
    %88 = arith.mulf %85, %87 : vector<16x512xf32>
    %89 = tpu.concatenate %60, %64, %68, %72, %56, %76, %80, %84, %88 in 0 : vector<16x512xf32>, vector<16x512xf32>, vector<16x512xf32>, vector<16x512xf32>, vector<16x512xf32>, vector<16x512xf32>, vector<16x512xf32>, vector<16x512xf32>, vector<16x512xf32> -> vector<144x512xf32>
    %c0_33 = arith.constant 0 : index
    %c0_34 = arith.constant 0 : index
    %90 = vector.load %arg6[%c0_33, %c0_34] : memref<3x144xf32, #tpu.memory_space<vmem>>, vector<3x144xf32>
    %cst_35 = arith.constant dense<0.000000e+00> : vector<3x512xf32>
    %91 = tpu.matmul %90, %89, %cst_35 {dimension_numbers = #tpu.dot_dimension_numbers<[1], [0], [0], [1], [0, 0, 1, 1], [], []>} : vector<3x144xf32>, vector<144x512xf32>, vector<3x512xf32> -> vector<3x512xf32>
    %c0_36 = arith.constant 0 : index
    %c0_37 = arith.constant 0 : index
    %92 = vector.load %arg7[%c0_36, %c0_37] : memref<3x1xf32, #tpu.memory_space<vmem>>, vector<3x1xf32>
    %93 = vector.broadcast %92 : vector<3x1xf32> to vector<3x512xf32>
    %94 = arith.addf %91, %93 : vector<3x512xf32>
    %95 = vector.extract_strided_slice %94 {offsets = [0, 0], sizes = [3, 256], strides = [1, 1]} : vector<3x512xf32> to vector<3x256xf32>
    %c0_38 = arith.constant 0 : index
    %c0_39 = arith.constant 0 : index
    %c0_40 = arith.constant 0 : index
    %96 = vector.load %arg8[%c0_38, %c0_39, %c0_40] : memref<2x3x256xf32, #tpu.memory_space<vmem>>, vector<1x3x256xf32>
    %97 = vector.shape_cast %96 : vector<1x3x256xf32> to vector<3x256xf32>
    %98 = vector.shape_cast %95 : vector<3x256xf32> to vector<1x3x256xf32>
    tpu.vector_store %arg8[%c0_38, %c0_39, %c0_40], %98 {strides = array<i32>} : memref<2x3x256xf32, #tpu.memory_space<vmem>>, vector<1x3x256xf32>,
    %99 = vector.extract_strided_slice %94 {offsets = [0, 256], sizes = [3, 256], strides = [1, 1]} : vector<3x512xf32> to vector<3x256xf32>
    %c1_41 = arith.constant 1 : index
    %c0_42 = arith.constant 0 : index
    %c0_43 = arith.constant 0 : index
    %100 = vector.load %arg8[%c1_41, %c0_42, %c0_43] : memref<2x3x256xf32, #tpu.memory_space<vmem>>, vector<1x3x256xf32>
    %101 = vector.shape_cast %100 : vector<1x3x256xf32> to vector<3x256xf32>
    %102 = vector.shape_cast %99 : vector<3x256xf32> to vector<1x3x256xf32>
    tpu.vector_store %arg8[%c1_41, %c0_42, %c0_43], %102 {strides = array<i32>} : memref<2x3x256xf32, #tpu.memory_space<vmem>>, vector<1x3x256xf32>,
    return
  }
  func.func @transform_0(%arg0: i32) -> (i32, i32, i32) {
    %c0_i32 = arith.constant 0 : i32
    %c0_i32_0 = arith.constant 0 : i32
    %c0_i32_1 = arith.constant 0 : i32
    return %arg0, %c0_i32, %c0_i32_0 : i32, i32, i32
  }
  func.func @transform_1(%arg0: i32) -> (i32, i32) {
    %c0_i32 = arith.constant 0 : i32
    %c0_i32_0 = arith.constant 0 : i32
    return %c0_i32, %arg0 : i32, i32
  }
  func.func @transform_2(%arg0: i32) -> (i32, i32) {
    %c0_i32 = arith.constant 0 : i32
    %c0_i32_0 = arith.constant 0 : i32
    %c0_i32_1 = arith.constant 0 : i32
    return %c0_i32, %c0_i32_0 : i32, i32
  }
  func.func @transform_3(%arg0: i32) -> (i32, i32) {
    %c0_i32 = arith.constant 0 : i32
    %c0_i32_0 = arith.constant 0 : i32
    %c0_i32_1 = arith.constant 0 : i32
    return %c0_i32, %c0_i32_0 : i32, i32
  }
  func.func @transform_4(%arg0: i32) -> (i32, i32) {
    %c0_i32 = arith.constant 0 : i32
    %c0_i32_0 = arith.constant 0 : i32
    %c0_i32_1 = arith.constant 0 : i32
    return %c0_i32, %c0_i32_0 : i32, i32
  }
  func.func @transform_5(%arg0: i32) -> (i32, i32) {
    %c0_i32 = arith.constant 0 : i32
    %c0_i32_0 = arith.constant 0 : i32
    %c0_i32_1 = arith.constant 0 : i32
    return %c0_i32, %c0_i32_0 : i32, i32
  }
  func.func @transform_6(%arg0: i32) -> (i32, i32) {
    %c0_i32 = arith.constant 0 : i32
    %c0_i32_0 = arith.constant 0 : i32
    %c0_i32_1 = arith.constant 0 : i32
    return %c0_i32, %c0_i32_0 : i32, i32
  }
  func.func @transform_7(%arg0: i32) -> (i32, i32, i32) {
    %c0_i32 = arith.constant 0 : i32
    %c0_i32_0 = arith.constant 0 : i32
    %c0_i32_1 = arith.constant 0 : i32
    return %arg0, %c0_i32, %c0_i32_0 : i32, i32, i32
  }
}

</mosaic_0001>

<llo_original>
// kernel: model_forward.1
$region0: #{model_forward.1}
  #allocation0 [shape = 'u32[]', space=smem, size = 0x4, offset = 0x4, fixed_abs, tag = 'smem constant byte address 0x4 - core index']
  #allocation1 [shape = 'u32[144,128]{1,0:T(1,128)}', space=vmem, size = 0x12000, scoped, tag = 'internal scratch']
  #allocation2 [shape = 'f32[27,512]{1,0:T(8,128)}', space=vmem, size = 0x10000, scoped, tag = 'scratch operand']
  %s0 = inlined_call_operand.vmem [shape: f32[4,3,256], index: 0, kind: input, shape index: {}]
  %s1 = inlined_call_operand.vmem [shape: f32[16,1024], index: 1, kind: input, shape index: {}]
  %s2 = inlined_call_operand.vmem [shape: f32[9,512], index: 2, kind: input, shape index: {}]
  %s3 = inlined_call_operand.vmem [shape: f32[16,27], index: 3, kind: input, shape index: {}]
  %s4 = inlined_call_operand.vmem [shape: f32[16,1], index: 4, kind: input, shape index: {}]
  %s5 = inlined_call_operand.vmem [shape: f32[3,144], index: 5, kind: input, shape index: {}]
  %s6 = inlined_call_operand.vmem [shape: f32[3,1], index: 6, kind: input, shape index: {}]
  %s7 = inlined_call_operand.vmem [shape: f32[4,3,256], index: 7, kind: output, shape index: {}]
  %s8 = sld [smem:[#allocation0]]
  $region84: #{model_forward.1} parent=0
    _
  %s10 = ssub.s32 1, %s8
  %s11 = scalar_select 0, %s10, %s8
  $region1: #{model_forward.1} parent=0
    #allocation3 [shape = 'u8[65536]{0}', space=vmem, size = 0x10000, scoped, tag = 'input window, operand 1']
    loop: start=0, step=1, limit=4
    $region2: #{model_forward.1} parent=1 // loop_pre_header
      _
    $region3: #{model_forward.1} parent=1 // loop_header
      %s13 = sphi 0, %s17
      %p14 = scmp.ge.s32.totalorder %s13, 4
      %s23 = sphi 0, %s25
      %s26 = sphi 0, %s23
      %s27 = sphi 0, %s26
      %s43 = sphi 0, %s27
      %s49 = sphi 0, %s51
      %s52 = sphi 0, %s49
      %s53 = sphi 0, %s52
      %s69 = sphi 0, %s53
      %s73 = sphi 0, %s73
      %s75 = sphi 0, %s73
      %s76 = sphi 0, %s75
      %s90 = sphi 0, %s76
      %s94 = sphi 0, %s94
      %s96 = sphi 0, %s94
      %s97 = sphi 0, %s96
      %s111 = sphi 0, %s97
      %s115 = sphi 0, %s115
      %s117 = sphi 0, %s115
      %s118 = sphi 0, %s117
      %s132 = sphi 0, %s118
      %s136 = sphi 0, %s136
      %s138 = sphi 0, %s136
      %s139 = sphi 0, %s138
      %s153 = sphi 0, %s139
      %s157 = sphi 0, %s157
      %s159 = sphi 0, %s157
      %s160 = sphi 0, %s159
      %s174 = sphi 0, %s160
      %s180 = sphi 0, %s182
      %s183 = sphi 0, %s180
      %s184 = sphi 0, %s183
      %s200 = sphi 0, %s184
    $region4: #{model_forward.1} parent=1 // loop_header_branch
      %16 = sbr.rel (%p14) target = $region8
    $region5: #{model_forward.1} parent=1 // loop_body
      %s18 = ssub.s32 %s13, 1
      %s19 = ssub.s32 %s13, 2
      %s20 = sadd.s32 %s13, 1
      %s21 = ssub.s32 %s13, %s20
      %p22 = scmp.eq.s32.totalorder %s21, 0
      %s24 = sadd.s32 %s23, 1
      %s25 = scalar_select %p22, %s23, %s24
      %p28 = pneg %p22
      %p29 = scmp.eq.s32.totalorder %s13, 1
      %p30 = por %p28, %p29
      %p31 = scmp.ne.s32.totalorder %s23, %s26
      %p32 = scmp.eq.s32.totalorder %s13, 0
      %p33 = por %p31, %p32
      %p34 = scmp.ne.s32.totalorder %s23, %s26
      %p35 = scmp.eq.s32.totalorder %s18, 1
      %p36 = por %p34, %p35
      %p37 = scmp.ne.s32.totalorder %s26, %s27
      %p38 = scmp.eq.s32.totalorder %s18, 0
      %p39 = por %p37, %p38
      %p40 = scmp.ne.s32.totalorder %s26, %s27
      %p41 = scmp.eq.s32.totalorder %s19, 1
      %p42 = por %p40, %p41
      %p44 = scmp.ne.s32.totalorder %s27, %s43
      %p45 = scmp.eq.s32.totalorder %s19, 0
      %p46 = por %p44, %p45
      %s47 = ssub.s32 %s13, %s20
      %p48 = scmp.eq.s32.totalorder %s47, 0
      %s50 = sadd.s32 %s49, 1
      %s51 = scalar_select %p48, %s49, %s50
      %p54 = pneg %p48
      %p55 = scmp.eq.s32.totalorder %s13, 1
      %p56 = por %p54, %p55
      %p57 = scmp.ne.s32.totalorder %s49, %s52
      %p58 = scmp.eq.s32.totalorder %s13, 0
      %p59 = por %p57, %p58
      %p60 = scmp.ne.s32.totalorder %s49, %s52
      %p61 = scmp.eq.s32.totalorder %s18, 1
      %p62 = por %p60, %p61
      %p63 = scmp.ne.s32.totalorder %s52, %s53
      %p64 = scmp.eq.s32.totalorder %s18, 0
      %p65 = por %p63, %p64
      %p66 = scmp.ne.s32.totalorder %s52, %s53
      %p67 = scmp.eq.s32.totalorder %s19, 1
      %p68 = por %p66, %p67
      %p70 = scmp.ne.s32.totalorder %s53, %s69
      %p71 = scmp.eq.s32.totalorder %s19, 0
      %p72 = por %p70, %p71
      %s74 = sadd.s32 %s73, 1
      %p77 = scmp.eq.s32.totalorder %s13, 1
      %p78 = scmp.ne.s32.totalorder %s73, %s75
      %p79 = scmp.eq.s32.totalorder %s13, 0
      %p80 = por %p78, %p79
      %p81 = scmp.ne.s32.totalorder %s73, %s75
      %p82 = scmp.eq.s32.totalorder %s18, 1
      %p83 = por %p81, %p82
      %p84 = scmp.ne.s32.totalorder %s75, %s76
      %p85 = scmp.eq.s32.totalorder %s18, 0
      %p86 = por %p84, %p85
      %p87 = scmp.ne.s32.totalorder %s75, %s76
      %p88 = scmp.eq.s32.totalorder %s19, 1
      %p89 = por %p87, %p88
      %p91 = scmp.ne.s32.totalorder %s76, %s90
      %p92 = scmp.eq.s32.totalorder %s19, 0
      %p93 = por %p91, %p92
      %s95 = sadd.s32 %s94, 1
      %p98 = scmp.eq.s32.totalorder %s13, 1
      %p99 = scmp.ne.s32.totalorder %s94, %s96
      %p100 = scmp.eq.s32.totalorder %s13, 0
      %p101 = por %p99, %p100
      %p102 = scmp.ne.s32.totalorder %s94, %s96
      %p103 = scmp.eq.s32.totalorder %s18, 1
      %p104 = por %p102, %p103
      %p105 = scmp.ne.s32.totalorder %s96, %s97
      %p106 = scmp.eq.s32.totalorder %s18, 0
      %p107 = por %p105, %p106
      %p108 = scmp.ne.s32.totalorder %s96, %s97
      %p109 = scmp.eq.s32.totalorder %s19, 1
      %p110 = por %p108, %p109
      %p112 = scmp.ne.s32.totalorder %s97, %s111
      %p113 = scmp.eq.s32.totalorder %s19, 0
      %p114 = por %p112, %p113
      %s116 = sadd.s32 %s115, 1
      %p119 = scmp.eq.s32.totalorder %s13, 1
      %p120 = scmp.ne.s32.totalorder %s115, %s117
      %p121 = scmp.eq.s32.totalorder %s13, 0
      %p122 = por %p120, %p121
      %p123 = scmp.ne.s32.totalorder %s115, %s117
      %p124 = scmp.eq.s32.totalorder %s18, 1
      %p125 = por %p123, %p124
      %p126 = scmp.ne.s32.totalorder %s117, %s118
      %p127 = scmp.eq.s32.totalorder %s18, 0
      %p128 = por %p126, %p127
      %p129 = scmp.ne.s32.totalorder %s117, %s118
      %p130 = scmp.eq.s32.totalorder %s19, 1
      %p131 = por %p129, %p130
      %p133 = scmp.ne.s32.totalorder %s118, %s132
      %p134 = scmp.eq.s32.totalorder %s19, 0
      %p135 = por %p133, %p134
      %s137 = sadd.s32 %s136, 1
      %p140 = scmp.eq.s32.totalorder %s13, 1
      %p141 = scmp.ne.s32.totalorder %s136, %s138
      %p142 = scmp.eq.s32.totalorder %s13, 0
      %p143 = por %p141, %p142
      %p144 = scmp.ne.s32.totalorder %s136, %s138
      %p145 = scmp.eq.s32.totalorder %s18, 1
      %p146 = por %p144, %p145
      %p147 = scmp.ne.s32.totalorder %s138, %s139
      %p148 = scmp.eq.s32.totalorder %s18, 0
      %p149 = por %p147, %p148
      %p150 = scmp.ne.s32.totalorder %s138, %s139
      %p151 = scmp.eq.s32.totalorder %s19, 1
      %p152 = por %p150, %p151
      %p154 = scmp.ne.s32.totalorder %s139, %s153
      %p155 = scmp.eq.s32.totalorder %s19, 0
      %p156 = por %p154, %p155
      %s158 = sadd.s32 %s157, 1
      %p161 = scmp.eq.s32.totalorder %s13, 1
      %p162 = scmp.ne.s32.totalorder %s157, %s159
      %p163 = scmp.eq.s32.totalorder %s13, 0
      %p164 = por %p162, %p163
      %p165 = scmp.ne.s32.totalorder %s157, %s159
      %p166 = scmp.eq.s32.totalorder %s18, 1
      %p167 = por %p165, %p166
      %p168 = scmp.ne.s32.totalorder %s159, %s160
      %p169 = scmp.eq.s32.totalorder %s18, 0
      %p170 = por %p168, %p169
      %p171 = scmp.ne.s32.totalorder %s159, %s160
      %p172 = scmp.eq.s32.totalorder %s19, 1
      %p173 = por %p171, %p172
      %p175 = scmp.ne.s32.totalorder %s160, %s174
      %p176 = scmp.eq.s32.totalorder %s19, 0
      %p177 = por %p175, %p176
      %s178 = ssub.s32 %s13, %s20
      %p179 = scmp.eq.s32.totalorder %s178, 0
      %s181 = sadd.s32 %s180, 1
      %s182 = scalar_select %p179, %s180, %s181
      %p185 = pneg %p179
      %p186 = scmp.eq.s32.totalorder %s13, 1
      %p187 = por %p185, %p186
      %p188 = scmp.ne.s32.totalorder %s180, %s183
      %p189 = scmp.eq.s32.totalorder %s13, 0
      %p190 = por %p188, %p189
      %p191 = scmp.ne.s32.totalorder %s180, %s183
      %p192 = scmp.eq.s32.totalorder %s18, 1
      %p193 = por %p191, %p192
      %p194 = scmp.ne.s32.totalorder %s183, %s184
      %p195 = scmp.eq.s32.totalorder %s18, 0
      %p196 = por %p194, %p195
      %p197 = scmp.ne.s32.totalorder %s183, %s184
      %p198 = scmp.eq.s32.totalorder %s19, 1
      %p199 = por %p197, %p198
      %p201 = scmp.ne.s32.totalorder %s184, %s200
      %p202 = scmp.eq.s32.totalorder %s19, 0
      %p203 = por %p201, %p202
      %p204 = scmp.le.s32.totalorder 1, %s13
      %p205 = scmp.lt.s32.totalorder %s13, 3
      %p206 = pnand %p204, %p205
      %p207 = pneg %p206
      // Predicated region
      $region9: #{model_forward.1} parent=5 // pred_check
        _
      $region10: #{model_forward.1} parent=5 // pred_check_branch
        %209 = sbr.rel (%p206) target = $region12
      $region11: #{model_forward.1} parent=5 // pred_region
        %s210 = ssub.s32 %s13, 1
        // Predicated region
        $region13: #{model_forward.1} parent=11 // pred_check
          %p211 = pneg %p86
        $region14: #{model_forward.1} parent=11 // pred_check_branch
          %213 = sbr.rel (%p211) target = $region16
        $region15: #{model_forward.1} parent=11 // pred_region
          _
        $region16: #{model_forward.1} parent=11 // pred_fallthru
          _
        // Predicated region
        $region17: #{model_forward.1} parent=11 // pred_check
          %p214 = pneg %p107
        $region18: #{model_forward.1} parent=11 // pred_check_branch
          %216 = sbr.rel (%p214) target = $region20
        $region19: #{model_forward.1} parent=11 // pred_region
          _
        $region20: #{model_forward.1} parent=11 // pred_fallthru
          _
        // Predicated region
        $region21: #{model_forward.1} parent=11 // pred_check
          %p217 = pneg %p128
        $region22: #{model_forward.1} parent=11 // pred_check_branch
          %219 = sbr.rel (%p217) target = $region24
        $region23: #{model_forward.1} parent=11 // pred_region
          _
        $region24: #{model_forward.1} parent=11 // pred_fallthru
          _
        // Predicated region
        $region25: #{model_forward.1} parent=11 // pred_check
          %p220 = pneg %p149
        $region26: #{model_forward.1} parent=11 // pred_check_branch
          %222 = sbr.rel (%p220) target = $region28
        $region27: #{model_forward.1} parent=11 // pred_region
          _
        $region28: #{model_forward.1} parent=11 // pred_fallthru
          _
        // Predicated region
        $region29: #{model_forward.1} parent=11 // pred_check
          %p223 = pneg %p170
        $region30: #{model_forward.1} parent=11 // pred_check_branch
          %225 = sbr.rel (%p223) target = $region32
        $region31: #{model_forward.1} parent=11 // pred_region
          _
        $region32: #{model_forward.1} parent=11 // pred_fallthru
          _
      $region12: #{model_forward.1} parent=5 // pred_fallthru
        _
      %p226 = scmp.lt.s32.totalorder %s13, 2
      // Predicated region
      $region33: #{model_forward.1} parent=5 // pred_check
        %p227 = pneg %p226
      $region34: #{model_forward.1} parent=5 // pred_check_branch
        %229 = sbr.rel (%p227) target = $region36
      $region35: #{model_forward.1} parent=5 // pred_region
        // Predicated region
        $region37: #{model_forward.1} parent=35 // pred_check
          %p230 = pneg %p33
        $region38: #{model_forward.1} parent=35 // pred_check_branch
          %232 = sbr.rel (%p230) target = $region40
        $region39: #{model_forward.1} parent=35 // pred_region
          %s233 = smul.u32 2, %s13
          %p234 = scmp.lt.s32.totalorder %s233, 3
          %s235 = scalar_select %p234, %s233, 3
          %s236 = smul.addr %s235, 2
          %s237 = smul.addr %s236, 4
          %s238 = scalar_lea.vmem %s0, %s237
          %s239 = smul.u32 2, %s13
        $region40: #{model_forward.1} parent=35 // pred_fallthru
          _
        // Predicated region
        $region41: #{model_forward.1} parent=35 // pred_check
          %p240 = pneg %p59
        $region42: #{model_forward.1} parent=35 // pred_check_branch
          %242 = sbr.rel (%p240) target = $region44
        $region43: #{model_forward.1} parent=35 // pred_region
          %s243 = sand.u32 %s49, 1
          %s244 = sand.u32 %s49, 1
          %s245 = smul.addr %s244, 64
          %s246 = scalar_lea.vmem [#allocation3], %s245
          %s247 = smul.u32 4, %s13
          %s248 = smul.addr %s247, 8
          %s249 = scalar_lea.vmem %s1, %s248
          // Predicated region
          $region45: #{model_forward.1} parent=43 // pred_check
            _
          $region46: #{model_forward.1} parent=43 // pred_check_branch
            %251 = sbr.rel (0) target = $region48
          $region47: #{model_forward.1} parent=43 // pred_region
            // Predicated region
            $region49: #{model_forward.1} parent=47 // pred_check
              _
            $region50: #{model_forward.1} parent=47 // pred_check_branch
              %253 = sbr.rel (0) target = $region52
            $region51: #{model_forward.1} parent=47 // pred_region
              loop: start=0, step=1, limit=1
              $region53: #{model_forward.1} parent=51 // loop_pre_header
                _
              $region54: #{model_forward.1} parent=51 // loop_header
                %s255 = sphi 0, %s259
                %p256 = scmp.ge.s32.totalorder %s255, 1
                %s260 = sphi %s249, %s249
                %s261 = sphi %s246, %s246
              $region55: #{model_forward.1} parent=51 // loop_header_branch
                %258 = sbr.rel (%p256) target = $region59
              $region56: #{model_forward.1} parent=51 // loop_body
                %v262 = vld [vmem:[%s260] sm:$0xff]
                %263 = vst [vmem:[%s261] sm:$0xff] %v262
                %v264 = vld [vmem:[%s260 + $0x8] sm:$0xff]
                %265 = vst [vmem:[%s261 + $0x8] sm:$0xff] %v264
                %v266 = vld [vmem:[%s260 + $0x10] sm:$0xff]
                %267 = vst [vmem:[%s261 + $0x10] sm:$0xff] %v266
                %v268 = vld [vmem:[%s260 + $0x18] sm:$0xff]
                %269 = vst [vmem:[%s261 + $0x18] sm:$0xff] %v268
                %v270 = vld [vmem:[%s260 + $0x40] sm:$0xff]
                %271 = vst [vmem:[%s261 + $0x20] sm:$0xff] %v270
                %v272 = vld [vmem:[%s260 + $0x48] sm:$0xff]
                %273 = vst [vmem:[%s261 + $0x28] sm:$0xff] %v272
                %v274 = vld [vmem:[%s260 + $0x50] sm:$0xff]
                %275 = vst [vmem:[%s261 + $0x30] sm:$0xff] %v274
                %v276 = vld [vmem:[%s260 + $0x58] sm:$0xff]
                %277 = vst [vmem:[%s261 + $0x38] sm:$0xff] %v276
              $region57: #{model_forward.1} parent=51 // loop_footer
                %s259 = sadd.s32 1, %s255
              $region58: #{model_forward.1} parent=51 // loop_footer_branch
                %254 = sbr.rel target = $region54
              $region59: #{model_forward.1} parent=51 // loop_exit
                _
            $region52: #{model_forward.1} parent=47 // pred_fallthru
              _
            // Predicated region
            $region60: #{model_forward.1} parent=47 // pred_check
              _
            $region61: #{model_forward.1} parent=47 // pred_check_branch
              %279 = sbr.rel target = $region63
            $region62: #{model_forward.1} parent=47 // pred_region
              _
            $region63: #{model_forward.1} parent=47 // pred_fallthru
              _
          $region48: #{model_forward.1} parent=43 // pred_fallthru
            _
          %280 = vnop
        $region44: #{model_forward.1} parent=35 // pred_fallthru
          _
      $region36: #{model_forward.1} parent=5 // pred_fallthru
        _
      %p281 = scmp.le.s32.totalorder 1, %s13
      %p282 = scmp.lt.s32.totalorder %s13, 3
      %p283 = pnand %p281, %p282
      %p284 = pneg %p283
      // Predicated region
      $region64: #{model_forward.1} parent=5 // pred_check
        _
      $region65: #{model_forward.1} parent=5 // pred_check_branch
        %286 = sbr.rel (%p283) target = $region67
      $region66: #{model_forward.1} parent=5 // pred_region
        %s287 = ssub.s32 %s13, 1
        %s288 = sand.u32 %s52, 1
        %s289 = sand.u32 %s52, 1
        %s290 = smul.addr %s289, 64
        %s291 = scalar_lea.vmem [#allocation3], %s290
        // Predicated region
        $region68: #{model_forward.1} parent=66 // pred_check
          %p292 = pneg %p65
        $region69: #{model_forward.1} parent=66 // pred_check_branch
          %294 = sbr.rel (%p292) target = $region71
        $region70: #{model_forward.1} parent=66 // pred_region
          _
        $region71: #{model_forward.1} parent=66 // pred_fallthru
          _
        %s295 = smul.u32 2, %s18
        %p296 = scmp.lt.s32.totalorder %s295, 3
        %s297 = scalar_select %p296, %s295, 3
        %s298 = smul.addr %s297, 2
        %s299 = smul.addr %s298, 4
        %s300 = scalar_lea.vmem %s0, %s299
        %p301 = pneg %p39
        %p302 = pneg %p36
        %s303 = sand.u32 %s52, 1
        %s304 = sand.u32 %s52, 1
        %s305 = smul.addr %s304, 64
        %s306 = scalar_lea.vmem [#allocation3], %s305
        %p307 = pneg %p65
        %p308 = pneg %p62
        %p309 = pneg %p86
        %p310 = pneg %p83
        %p311 = pneg %p107
        %p312 = pneg %p104
        %p313 = pneg %p128
        %p314 = pneg %p125
        %p315 = pneg %p149
        %p316 = pneg %p146
        %p317 = pneg %p170
        %p318 = pneg %p167
        %p319 = pneg %p196
        %p320 = pneg %p193
        %s321 = smul.u32 2, %s18
        %p322 = scmp.lt.s32.totalorder %s321, 3
        %s323 = scalar_select %p322, %s321, 3
        %s324 = smul.addr %s323, 2
        %s325 = smul.addr %s324, 4
        %s326 = scalar_lea.vmem %s7, %s325
        %s327 = smul.u32 2, %s18
        %p328 = scmp.lt.s32.totalorder %s327, 3
        %s329 = scalar_select %p328, %s327, 3
        %s330 = smul.addr %s329, 2
        %s331 = smul.addr %s330, 4
        %s332 = scalar_lea.vmem %s0, %s331
        %s333 = smul.u32 2, %s18
        %s334 = smul.u32 4, %s18
        %s335 = smul.u32 2, %s18
        %p336 = scmp.lt.s32.totalorder %s335, 3
        %s337 = scalar_select %p336, %s335, 3
        %s338 = smul.addr %s337, 2
        %s339 = smul.addr %s338, 4
        %s340 = scalar_lea.vmem %s7, %s339
        %s341 = smul.u32 2, %s18
        %v342 = vld [vmem:[%s332] sm:$0x77]
        %s343 = scalar_lea.vmem %s332, 8
        %v344 = vld [vmem:[%s343] sm:$0x77]
        %v346 = vcombine.high %v342, %v342
        %v349 = vcombine.high %v344, %v344
        %v351 = vld [vmem:[%s2] sm:$0xff]
        %v352 = vld [vmem:[%s2 + $0x8] sm:$0xff]
        %v353 = vld [vmem:[%s2 + $0x10] sm:$0xff]
        %v354 = vld [vmem:[%s2 + $0x18] sm:$0xff]
        %v355 = vld [vmem:[%s2 + $0x20] sm:$0x1]
        %v356 = vld [vmem:[%s2 + $0x28] sm:$0x1]
        %v357 = vld [vmem:[%s2 + $0x30] sm:$0x1]
        %v358 = vld [vmem:[%s2 + $0x38] sm:$0x1]
        %359 = vrot.lane.b32.xlu0 %v342, 17
        %v360 = vpop.permute.xlu0 %359
        %361 = vrot.lane.b32.xlu0 %v346, 17
        %v362 = vpop.permute.xlu0 %361
        %363 = vrot.lane.b32.xlu0 %v344, 17
        %v364 = vpop.permute.xlu0 %363
        %365 = vrot.lane.b32.xlu0 %v349, 17
        %v366 = vpop.permute.xlu0 %365
        %v367 = vlaneseq
        %v368 = vand.u32 %v367, 127
        %vm369 = vcmp.lt.s32.totalorder %v368, 17
        %v370 = vsel %vm369, %v364, %v366
        %v371 = vsel %vm369, %v362, %v364
        %v372 = vsel %vm369, %v360, %v362
        %v373 = vsel %vm369, %v366, %v360
        %v374 = vlaneseq
        %v375 = vshrl.u32 %v374, 7
        %v376 = vsub.s32 0, %v375
        %v377 = vrot.slane %v351, %v376
        %v378 = vlaneseq
        %v379 = vshrl.u32 %v378, 7
        %v380 = vsub.s32 0, %v379
        %v381 = vrot.slane %v352, %v380
        %v382 = vlaneseq
        %v383 = vshrl.u32 %v382, 7
        %v384 = vsub.s32 0, %v383
        %v385 = vrot.slane %v353, %v384
        %v386 = vlaneseq
        %v387 = vshrl.u32 %v386, 7
        %v388 = vsub.s32 0, %v387
        %v389 = vrot.slane %v354, %v388
        %v390 = vmul.f32 %v373, %v377
        %v391 = vmul.f32 %v372, %v381
        %v392 = vmul.f32 %v371, %v385
        %v393 = vmul.f32 %v370, %v389
        %394 = vst [vmem:[#allocation2] sm:$0x7] %v390
        %395 = vst [vmem:[#allocation2 + $0x8] sm:$0x7] %v391
        %396 = vst [vmem:[#allocation2 + $0x10] sm:$0x7] %v392
        %397 = vst [vmem:[#allocation2 + $0x18] sm:$0x7] %v393
        %398 = vrot.lane.b32.xlu0 %v342, 16
        %v399 = vpop.permute.xlu0 %398
        %400 = vrot.lane.b32.xlu0 %v346, 16
        %v401 = vpop.permute.xlu0 %400
        %402 = vrot.lane.b32.xlu0 %v344, 16
        %v403 = vpop.permute.xlu0 %402
        %404 = vrot.lane.b32.xlu0 %v349, 16
        %v405 = vpop.permute.xlu0 %404
        %vm406 = vcmp.lt.s32.totalorder %v368, 16
        %v407 = vsel %vm406, %v403, %v405
        %v408 = vsel %vm406, %v401, %v403
        %v409 = vsel %vm406, %v399, %v401
        %v410 = vsel %vm406, %v405, %v399
        %v411 = vlaneseq
        %v412 = vshrl.u32 %v411, 7
        %v413 = vsub.s32 1, %v412
        %v414 = vrot.slane %v351, %v413
        %v415 = vlaneseq
        %v416 = vshrl.u32 %v415, 7
        %v417 = vsub.s32 1, %v416
        %v418 = vrot.slane %v352, %v417
        %v419 = vlaneseq
        %v420 = vshrl.u32 %v419, 7
        %v421 = vsub.s32 1, %v420
        %v422 = vrot.slane %v353, %v421
        %v423 = vlaneseq
        %v424 = vshrl.u32 %v423, 7
        %v425 = vsub.s32 1, %v424
        %v426 = vrot.slane %v354, %v425
        %v427 = vmul.f32 %v410, %v414
        %v428 = vmul.f32 %v409, %v418
        %v429 = vmul.f32 %v408, %v422
        %v430 = vmul.f32 %v407, %v426
        %v435 = vrot.slane %v427, 5
        %v436 = vrot.slane %v428, 5
        %v437 = vrot.slane %v429, 5
        %v438 = vrot.slane %v430, 5
        %443 = vst [vmem:[#allocation2] sm:$0x38] %v435
        %444 = vst [vmem:[#allocation2 + $0x8] sm:$0x38] %v436
        %445 = vst [vmem:[#allocation2 + $0x10] sm:$0x38] %v437
        %446 = vst [vmem:[#allocation2 + $0x18] sm:$0x38] %v438
        %447 = vrot.lane.b32.xlu0 %v342, 15
        %v448 = vpop.permute.xlu0 %447
        %449 = vrot.lane.b32.xlu0 %v346, 15
        %v450 = vpop.permute.xlu0 %449
        %451 = vrot.lane.b32.xlu0 %v344, 15
        %v452 = vpop.permute.xlu0 %451
        %453 = vrot.lane.b32.xlu0 %v349, 15
        %v454 = vpop.permute.xlu0 %453
        %vm455 = vcmp.lt.s32.totalorder %v368, 15
        %v456 = vsel %vm455, %v452, %v454
        %v457 = vsel %vm455, %v450, %v452
        %v458 = vsel %vm455, %v448, %v450
        %v459 = vsel %vm455, %v454, %v448
        %v460 = vlaneseq
        %v461 = vshrl.u32 %v460, 7
        %v462 = vsub.s32 2, %v461
        %v463 = vrot.slane %v351, %v462
        %v464 = vlaneseq
        %v465 = vshrl.u32 %v464, 7
        %v466 = vsub.s32 2, %v465
        %v467 = vrot.slane %v352, %v466
        %v468 = vlaneseq
        %v469 = vshrl.u32 %v468, 7
        %v470 = vsub.s32 2, %v469
        %v471 = vrot.slane %v353, %v470
        %v472 = vlaneseq
        %v473 = vshrl.u32 %v472, 7
        %v474 = vsub.s32 2, %v473
        %v475 = vrot.slane %v354, %v474
        %v476 = vmul.f32 %v459, %v463
        %v477 = vmul.f32 %v458, %v467
        %v478 = vmul.f32 %v457, %v471
        %v479 = vmul.f32 %v456, %v475
        %v484 = vrot.slane %v476, 2
        %v485 = vrot.slane %v477, 2
        %v486 = vrot.slane %v478, 2
        %v487 = vrot.slane %v479, 2
        %492 = vst [vmem:[#allocation2] sm:$0xc0] %v484
        %493 = vst [vmem:[#allocation2 + $0x8] sm:$0xc0] %v485
        %494 = vst [vmem:[#allocation2 + $0x10] sm:$0xc0] %v486
        %495 = vst [vmem:[#allocation2 + $0x18] sm:$0xc0] %v487
        %496 = vst [vmem:[#allocation2 + $0x20] sm:$0x1] %v484
        %497 = vst [vmem:[#allocation2 + $0x28] sm:$0x1] %v485
        %498 = vst [vmem:[#allocation2 + $0x30] sm:$0x1] %v486
        %499 = vst [vmem:[#allocation2 + $0x38] sm:$0x1] %v487
        %500 = vrot.lane.b32.xlu0 %v342, 1
        %v501 = vpop.permute.xlu0 %500
        %502 = vrot.lane.b32.xlu0 %v346, 1
        %v503 = vpop.permute.xlu0 %502
        %504 = vrot.lane.b32.xlu0 %v344, 1
        %v505 = vpop.permute.xlu0 %504
        %506 = vrot.lane.b32.xlu0 %v349, 1
        %v507 = vpop.permute.xlu0 %506
        %vm508 = vcmp.lt.s32.totalorder %v368, 1
        %v509 = vsel %vm508, %v505, %v507
        %v510 = vsel %vm508, %v503, %v505
        %v511 = vsel %vm508, %v501, %v503
        %v512 = vsel %vm508, %v507, %v501
        %v513 = vlaneseq
        %v514 = vshrl.u32 %v513, 7
        %v515 = vsub.s32 3, %v514
        %v516 = vrot.slane %v351, %v515
        %v517 = vlaneseq
        %v518 = vshrl.u32 %v517, 7
        %v519 = vsub.s32 3, %v518
        %v520 = vrot.slane %v352, %v519
        %v521 = vlaneseq
        %v522 = vshrl.u32 %v521, 7
        %v523 = vsub.s32 3, %v522
        %v524 = vrot.slane %v353, %v523
        %v525 = vlaneseq
        %v526 = vshrl.u32 %v525, 7
        %v527 = vsub.s32 3, %v526
        %v528 = vrot.slane %v354, %v527
        %v529 = vmul.f32 %v512, %v516
        %v530 = vmul.f32 %v511, %v520
        %v531 = vmul.f32 %v510, %v524
        %v532 = vmul.f32 %v509, %v528
        %v537 = vrot.slane %v529, 7
        %v538 = vrot.slane %v530, 7
        %v539 = vrot.slane %v531, 7
        %v540 = vrot.slane %v532, 7
        %545 = vst [vmem:[#allocation2 + $0x20] sm:$0xe] %v537
        %546 = vst [vmem:[#allocation2 + $0x28] sm:$0xe] %v538
        %547 = vst [vmem:[#allocation2 + $0x30] sm:$0xe] %v539
        %548 = vst [vmem:[#allocation2 + $0x38] sm:$0xe] %v540
        %v549 = vrot.slane %v342, 4
        %v550 = vrot.slane %v346, 4
        %v551 = vrot.slane %v344, 4
        %v552 = vrot.slane %v349, 4
        %557 = vst [vmem:[#allocation2 + $0x20] sm:$0x70] %v549
        %558 = vst [vmem:[#allocation2 + $0x28] sm:$0x70] %v550
        %559 = vst [vmem:[#allocation2 + $0x30] sm:$0x70] %v551
        %560 = vst [vmem:[#allocation2 + $0x38] sm:$0x70] %v552
        %561 = vrot.lane.b32.xlu0 %v342, 127
        %v562 = vpop.permute.xlu0 %561
        %563 = vrot.lane.b32.xlu0 %v346, 127
        %v564 = vpop.permute.xlu0 %563
        %565 = vrot.lane.b32.xlu0 %v344, 127
        %v566 = vpop.permute.xlu0 %565
        %567 = vrot.lane.b32.xlu0 %v349, 127
        %v568 = vpop.permute.xlu0 %567
        %vm569 = vcmp.lt.s32.totalorder %v368, 127
        %v570 = vsel %vm569, %v566, %v568
        %v571 = vsel %vm569, %v564, %v566
        %v572 = vsel %vm569, %v562, %v564
        %v573 = vsel %vm569, %v568, %v562
        %v574 = vlaneseq
        %v575 = vshrl.u32 %v574, 7
        %v576 = vsub.s32 5, %v575
        %v577 = vrot.slane %v351, %v576
        %v578 = vlaneseq
        %v579 = vshrl.u32 %v578, 7
        %v580 = vsub.s32 5, %v579
        %v581 = vrot.slane %v352, %v580
        %v582 = vlaneseq
        %v583 = vshrl.u32 %v582, 7
        %v584 = vsub.s32 5, %v583
        %v585 = vrot.slane %v353, %v584
        %v586 = vlaneseq
        %v587 = vshrl.u32 %v586, 7
        %v588 = vsub.s32 5, %v587
        %v589 = vrot.slane %v354, %v588
        %v590 = vmul.f32 %v572, %v577
        %v591 = vmul.f32 %v571, %v581
        %v592 = vmul.f32 %v570, %v585
        %v593 = vmul.f32 %v573, %v589
        %v598 = vrot.slane %v590, 1
        %v599 = vrot.slane %v591, 1
        %v600 = vrot.slane %v592, 1
        %v601 = vrot.slane %v593, 1
        %606 = vst [vmem:[#allocation2 + $0x20] sm:$0x80] %v598
        %607 = vst [vmem:[#allocation2 + $0x28] sm:$0x80] %v599
        %608 = vst [vmem:[#allocation2 + $0x30] sm:$0x80] %v600
        %609 = vst [vmem:[#allocation2 + $0x38] sm:$0x80] %v601
        %610 = vst [vmem:[#allocation2 + $0x40] sm:$0x3] %v598
        %611 = vst [vmem:[#allocation2 + $0x48] sm:$0x3] %v599
        %612 = vst [vmem:[#allocation2 + $0x50] sm:$0x3] %v600
        %613 = vst [vmem:[#allocation2 + $0x58] sm:$0x3] %v601
        %614 = vrot.lane.b32.xlu0 %v342, 113
        %v615 = vpop.permute.xlu0 %614
        %616 = vrot.lane.b32.xlu0 %v346, 113
        %v617 = vpop.permute.xlu0 %616
        %618 = vrot.lane.b32.xlu0 %v344, 113
        %v619 = vpop.permute.xlu0 %618
        %620 = vrot.lane.b32.xlu0 %v349, 113
        %v621 = vpop.permute.xlu0 %620
        %vm622 = vcmp.lt.s32.totalorder %v368, 113
        %v623 = vsel %vm622, %v619, %v621
        %v624 = vsel %vm622, %v617, %v619
        %v625 = vsel %vm622, %v615, %v617
        %v626 = vsel %vm622, %v621, %v615
        %v627 = vlaneseq
        %v628 = vshrl.u32 %v627, 7
        %v629 = vsub.s32 6, %v628
        %v630 = vrot.slane %v351, %v629
        %v631 = vlaneseq
        %v632 = vshrl.u32 %v631, 7
        %v633 = vsub.s32 6, %v632
        %v634 = vrot.slane %v352, %v633
        %v635 = vlaneseq
        %v636 = vshrl.u32 %v635, 7
        %v637 = vsub.s32 6, %v636
        %v638 = vrot.slane %v353, %v637
        %v639 = vlaneseq
        %v640 = vshrl.u32 %v639, 7
        %v641 = vsub.s32 6, %v640
        %v642 = vrot.slane %v354, %v641
        %v643 = vmul.f32 %v625, %v630
        %v644 = vmul.f32 %v624, %v634
        %v645 = vmul.f32 %v623, %v638
        %v646 = vmul.f32 %v626, %v642
        %v651 = vrot.slane %v643, 6
        %v652 = vrot.slane %v644, 6
        %v653 = vrot.slane %v645, 6
        %v654 = vrot.slane %v646, 6
        %659 = vst [vmem:[#allocation2 + $0x40] sm:$0x1c] %v651
        %660 = vst [vmem:[#allocation2 + $0x48] sm:$0x1c] %v652
        %661 = vst [vmem:[#allocation2 + $0x50] sm:$0x1c] %v653
        %662 = vst [vmem:[#allocation2 + $0x58] sm:$0x1c] %v654
        %663 = vrot.lane.b32.xlu0 %v342, 112
        %v664 = vpop.permute.xlu0 %663
        %665 = vrot.lane.b32.xlu0 %v346, 112
        %v666 = vpop.permute.xlu0 %665
        %667 = vrot.lane.b32.xlu0 %v344, 112
        %v668 = vpop.permute.xlu0 %667
        %669 = vrot.lane.b32.xlu0 %v349, 112
        %v670 = vpop.permute.xlu0 %669
        %vm671 = vcmp.lt.s32.totalorder %v368, 112
        %v672 = vsel %vm671, %v668, %v670
        %v673 = vsel %vm671, %v666, %v668
        %v674 = vsel %vm671, %v664, %v666
        %v675 = vsel %vm671, %v670, %v664
        %v676 = vlaneseq
        %v677 = vshrl.u32 %v676, 7
        %v678 = vsub.s32 7, %v677
        %v679 = vrot.slane %v351, %v678
        %v680 = vlaneseq
        %v681 = vshrl.u32 %v680, 7
        %v682 = vsub.s32 7, %v681
        %v683 = vrot.slane %v352, %v682
        %v684 = vlaneseq
        %v685 = vshrl.u32 %v684, 7
        %v686 = vsub.s32 7, %v685
        %v687 = vrot.slane %v353, %v686
        %v688 = vlaneseq
        %v689 = vshrl.u32 %v688, 7
        %v690 = vsub.s32 7, %v689
        %v691 = vrot.slane %v354, %v690
        %v692 = vmul.f32 %v674, %v679
        %v693 = vmul.f32 %v673, %v683
        %v694 = vmul.f32 %v672, %v687
        %v695 = vmul.f32 %v675, %v691
        %v700 = vrot.slane %v692, 3
        %v701 = vrot.slane %v693, 3
        %v702 = vrot.slane %v694, 3
        %v703 = vrot.slane %v695, 3
        %708 = vst [vmem:[#allocation2 + $0x40] sm:$0xe0] %v700
        %709 = vst [vmem:[#allocation2 + $0x48] sm:$0xe0] %v701
        %710 = vst [vmem:[#allocation2 + $0x50] sm:$0xe0] %v702
        %711 = vst [vmem:[#allocation2 + $0x58] sm:$0xe0] %v703
        %712 = vrot.lane.b32.xlu0 %v342, 111
        %v713 = vpop.permute.xlu0 %712
        %714 = vrot.lane.b32.xlu0 %v346, 111
        %v715 = vpop.permute.xlu0 %714
        %716 = vrot.lane.b32.xlu0 %v344, 111
        %v717 = vpop.permute.xlu0 %716
        %718 = vrot.lane.b32.xlu0 %v349, 111
        %v719 = vpop.permute.xlu0 %718
        %vm720 = vcmp.lt.s32.totalorder %v368, 111
        %v721 = vsel %vm720, %v717, %v719
        %v722 = vsel %vm720, %v715, %v717
        %v723 = vsel %vm720, %v713, %v715
        %v724 = vsel %vm720, %v719, %v713
        %v725 = vlaneseq
        %v726 = vshrl.u32 %v725, 7
        %v727 = vsub.s32 0, %v726
        %v728 = vrot.slane %v355, %v727
        %v729 = vlaneseq
        %v730 = vshrl.u32 %v729, 7
        %v731 = vsub.s32 0, %v730
        %v732 = vrot.slane %v356, %v731
        %v733 = vlaneseq
        %v734 = vshrl.u32 %v733, 7
        %v735 = vsub.s32 0, %v734
        %v736 = vrot.slane %v357, %v735
        %v737 = vlaneseq
        %v738 = vshrl.u32 %v737, 7
        %v739 = vsub.s32 0, %v738
        %v740 = vrot.slane %v358, %v739
        %v741 = vmul.f32 %v723, %v728
        %v742 = vmul.f32 %v722, %v732
        %v743 = vmul.f32 %v721, %v736
        %v744 = vmul.f32 %v724, %v740
        %745 = vst [vmem:[#allocation2 + $0x60] sm:$0x7] %v741
        %746 = vst [vmem:[#allocation2 + $0x68] sm:$0x7] %v742
        %747 = vst [vmem:[#allocation2 + $0x70] sm:$0x7] %v743
        %748 = vst [vmem:[#allocation2 + $0x78] sm:$0x7] %v744
        %v749 = vld [vmem:[%s3] sm:$0xff]
        %v750 = vld [vmem:[%s3 + $0x8] sm:$0xff]
        %v751 = vld [vmem:[#allocation2] sm:$0xff]
        %v752 = vld [vmem:[#allocation2 + $0x8] sm:$0xff]
        %v753 = vld [vmem:[#allocation2 + $0x10] sm:$0xff]
        %v754 = vld [vmem:[#allocation2 + $0x18] sm:$0xff]
        %v755 = vld [vmem:[#allocation2 + $0x20] sm:$0xff]
        %v756 = vld [vmem:[#allocation2 + $0x28] sm:$0xff]
        %v757 = vld [vmem:[#allocation2 + $0x30] sm:$0xff]
        %v758 = vld [vmem:[#allocation2 + $0x38] sm:$0xff]
        %v759 = vld [vmem:[#allocation2 + $0x40] sm:$0xff]
        %v760 = vld [vmem:[#allocation2 + $0x48] sm:$0xff]
        %v761 = vld [vmem:[#allocation2 + $0x50] sm:$0xff]
        %v762 = vld [vmem:[#allocation2 + $0x58] sm:$0xff]
        %v763 = vld [vmem:[#allocation2 + $0x60] sm:$0x7]
        %v764 = vld [vmem:[#allocation2 + $0x68] sm:$0x7]
        %v765 = vld [vmem:[#allocation2 + $0x70] sm:$0x7]
        %v766 = vld [vmem:[#allocation2 + $0x78] sm:$0x7]
        %v767 = vld [vmem:[%s4] sm:$0xff]
        %v768 = vld [vmem:[%s4 + $0x8] sm:$0xff]
        %770 = vset.pattern.permute.xlu0 0
        %771 = vperm.xlu0 %770, %v767
        %v772 = vpop.permute.xlu0 %771
        %775 = vset.pattern.permute.xlu0 0
        %776 = vperm.xlu0 %775, %v768
        %v777 = vpop.permute.xlu0 %776
        %vm779 = vcmask 220160
        %v781 = vsel %vm779, %v749, 0
        %v784 = vsel %vm779, %v750, 0
        %vm786 = vcmask 1042432
        %v788 = vsel %vm786, %v763, 0
        %v791 = vsel %vm786, %v764, 0
        %v794 = vsel %vm786, %v765, 0
        %v797 = vsel %vm786, %v766, 0
        %799 = vmatprep.subr.mxu0 0.0
        %800 = vmatpush1.msra.mxu0 0.0
        %801 = vmatprep.subr.mxu0 0.0
        %802 = vmatpush1.msra.mxu0 0.0
        %803 = vmatprep.subr.mxu0 0.0
        %804 = vmatpush1.msra.mxu0 0.0
        %805 = vmatprep.subr.mxu0 0.0
        %806 = vmatpush1.msra.mxu0 0.0
        %807 = vmatprep.subr.mxu0 0.0
        %808 = vmatpush1.msra.mxu0 0.0
        %809 = vmatprep.subr.mxu0 0.0
        %810 = vmatpush1.msra.mxu0 0.0
        %811 = vmatprep.subr.mxu0 0.0
        %812 = vmatpush1.msra.mxu0 0.0
        %813 = vmatprep.subr.mxu0 0.0
        %814 = vmatpush1.msra.mxu0 0.0
        %815 = vmatprep.subr.mxu0 0.0
        %816 = vmatpush1.msra.mxu0 0.0
        %817 = vmatprep.subr.mxu0 0.0
        %818 = vmatpush1.msra.mxu0 0.0
        %819 = vmatprep.subr.mxu0 0.0
        %820 = vmatpush1.msra.mxu0 0.0
        %821 = vmatprep.subr.mxu0 0.0
        %822 = vmatpush1.msra.mxu0 0.0
        %823 = vmatprep.subr.mxu0 %v791
        %824 = vmatpush1.msra.mxu0 %v788
        %825 = vmatprep.subr.mxu0 %v760
        %826 = vmatpush1.msra.mxu0 %v759
        %827 = vmatprep.subr.mxu0 %v756
        %828 = vmatpush1.msra.mxu0 %v755
        %829 = vmatprep.subr.mxu0 %v752
        %830 = vmatpush1.msra.mxu0 %v751
        %831 = vmatprep.subr.mxu0 0.0
        %832 = vmatpush2.msra.mxu0 0.0
        %833 = vmatprep.subr.mxu0 0.0
        %834 = vmatpush2.msra.mxu0 0.0
        %835 = vmatprep.subr.mxu0 0.0
        %836 = vmatpush2.msra.mxu0 0.0
        %837 = vmatprep.subr.mxu0 0.0
        %838 = vmatpush2.msra.mxu0 0.0
        %839 = vmatprep.subr.mxu0 0.0
        %840 = vmatpush2.msra.mxu0 0.0
        %841 = vmatprep.subr.mxu0 0.0
        %842 = vmatpush2.msra.mxu0 0.0
        %843 = vmatprep.subr.mxu0 0.0
        %844 = vmatpush2.msra.mxu0 0.0
        %845 = vmatprep.subr.mxu0 0.0
        %846 = vmatpush2.msra.mxu0 0.0
        %847 = vmatprep.subr.mxu0 0.0
        %848 = vmatpush2.msra.mxu0 0.0
        %849 = vmatprep.subr.mxu0 0.0
        %850 = vmatpush2.msra.mxu0 0.0
        %851 = vmatprep.subr.mxu0 0.0
        %852 = vmatpush2.msra.mxu0 0.0
        %853 = vmatprep.subr.mxu0 0.0
        %854 = vmatpush2.msra.mxu0 0.0
        %855 = vmatprep.subr.mxu0 0.0
        %856 = vmatpush2.msra.mxu0 0.0
        %857 = vmatprep.subr.mxu0 0.0
        %858 = vmatpush2.msra.mxu0 0.0
        %859 = vmatprep.subr.mxu0 0.0
        %860 = vmatpush2.msra.mxu0 0.0
        %861 = vmatprep.subr.mxu0 0.0
        %862 = vmatpush2.msra.mxu0 0.0
        %863 = vmatprep.mubr.f32.mxu0 0.0
        %864 = vmatmul.mubr.f32.gmra.mxu0 %v781
        %v865 = vpop.f32.mrf.mxu0
        %v866 = vadd.f32 %v772, %v865
        %v867 = vpop.f32.mrf.mxu0
        %v868 = vadd.f32 %v772, %v867
        %869 = vmatprep.mubr.f32.mxu0 0.0
        %870 = vmatmul.mubr.f32.gmra.mxu0 %v784
        %v871 = vpop.f32.mrf.mxu0
        %v872 = vadd.f32 %v777, %v871
        %v873 = vpop.f32.mrf.mxu0
        %v874 = vadd.f32 %v777, %v873
        %875 = vdwg.mxu0
        %876 = vmatprep.subr.mxu0 0.0
        %877 = vmatpush1.msra.mxu0 0.0
        %878 = vmatprep.subr.mxu0 0.0
        %879 = vmatpush1.msra.mxu0 0.0
        %880 = vmatprep.subr.mxu0 0.0
        %881 = vmatpush1.msra.mxu0 0.0
        %882 = vmatprep.subr.mxu0 0.0
        %883 = vmatpush1.msra.mxu0 0.0
        %884 = vmatprep.subr.mxu0 0.0
        %885 = vmatpush1.msra.mxu0 0.0
        %886 = vmatprep.subr.mxu0 0.0
        %887 = vmatpush1.msra.mxu0 0.0
        %888 = vmatprep.subr.mxu0 0.0
        %889 = vmatpush1.msra.mxu0 0.0
        %890 = vmatprep.subr.mxu0 0.0
        %891 = vmatpush1.msra.mxu0 0.0
        %892 = vmatprep.subr.mxu0 0.0
        %893 = vmatpush1.msra.mxu0 0.0
        %894 = vmatprep.subr.mxu0 0.0
        %895 = vmatpush1.msra.mxu0 0.0
        %896 = vmatprep.subr.mxu0 0.0
        %897 = vmatpush1.msra.mxu0 0.0
        %898 = vmatprep.subr.mxu0 0.0
        %899 = vmatpush1.msra.mxu0 0.0
        %900 = vmatprep.subr.mxu0 %v797
        %901 = vmatpush1.msra.mxu0 %v794
        %902 = vmatprep.subr.mxu0 %v762
        %903 = vmatpush1.msra.mxu0 %v761
        %904 = vmatprep.subr.mxu0 %v758
        %905 = vmatpush1.msra.mxu0 %v757
        %906 = vmatprep.subr.mxu0 %v754
        %907 = vmatpush1.msra.mxu0 %v753
        %908 = vmatprep.subr.mxu0 0.0
        %909 = vmatpush2.msra.mxu0 0.0
        %910 = vmatprep.subr.mxu0 0.0
        %911 = vmatpush2.msra.mxu0 0.0
        %912 = vmatprep.subr.mxu0 0.0
        %913 = vmatpush2.msra.mxu0 0.0
        %914 = vmatprep.subr.mxu0 0.0
        %915 = vmatpush2.msra.mxu0 0.0
        %916 = vmatprep.subr.mxu0 0.0
        %917 = vmatpush2.msra.mxu0 0.0
        %918 = vmatprep.subr.mxu0 0.0
        %919 = vmatpush2.msra.mxu0 0.0
        %920 = vmatprep.subr.mxu0 0.0
        %921 = vmatpush2.msra.mxu0 0.0
        %922 = vmatprep.subr.mxu0 0.0
        %923 = vmatpush2.msra.mxu0 0.0
        %924 = vmatprep.subr.mxu0 0.0
        %925 = vmatpush2.msra.mxu0 0.0
        %926 = vmatprep.subr.mxu0 0.0
        %927 = vmatpush2.msra.mxu0 0.0
        %928 = vmatprep.subr.mxu0 0.0
        %929 = vmatpush2.msra.mxu0 0.0
        %930 = vmatprep.subr.mxu0 0.0
        %931 = vmatpush2.msra.mxu0 0.0
        %932 = vmatprep.subr.mxu0 0.0
        %933 = vmatpush2.msra.mxu0 0.0
        %934 = vmatprep.subr.mxu0 0.0
        %935 = vmatpush2.msra.mxu0 0.0
        %936 = vmatprep.subr.mxu0 0.0
        %937 = vmatpush2.msra.mxu0 0.0
        %938 = vmatprep.subr.mxu0 0.0
        %939 = vmatpush2.msra.mxu0 0.0
        %940 = vmatprep.mubr.f32.mxu0 0.0
        %941 = vmatmul.mubr.f32.gmra.mxu0 %v781
        %v942 = vpop.f32.mrf.mxu0
        %v943 = vadd.f32 %v772, %v942
        %v944 = vpop.f32.mrf.mxu0
        %v945 = vadd.f32 %v772, %v944
        %946 = vmatprep.mubr.f32.mxu0 0.0
        %947 = vmatmul.mubr.f32.gmra.mxu0 %v784
        %v948 = vpop.f32.mrf.mxu0
        %v949 = vadd.f32 %v777, %v948
        %v950 = vpop.f32.mrf.mxu0
        %v951 = vadd.f32 %v777, %v950
        %952 = vdwg.mxu0
        %v953 = vmax.f32 %v866, 0.0
        %v954 = vmax.f32 %v868, 0.0
        %v955 = vmax.f32 %v943, 0.0
        %v956 = vmax.f32 %v945, 0.0
        %v957 = vmax.f32 %v872, 0.0
        %v958 = vmax.f32 %v874, 0.0
        %v959 = vmax.f32 %v949, 0.0
        %v960 = vmax.f32 %v951, 0.0
        %v961 = vld [vmem:[%s291] sm:$0xff]
        %v962 = vld [vmem:[%s291 + $0x8] sm:$0xff]
        %v963 = vld [vmem:[%s291 + $0x10] sm:$0xff]
        %v964 = vld [vmem:[%s291 + $0x18] sm:$0xff]
        %v965 = vld [vmem:[%s291 + $0x20] sm:$0xff]
        %v966 = vld [vmem:[%s291 + $0x28] sm:$0xff]
        %v967 = vld [vmem:[%s291 + $0x30] sm:$0xff]
        %v968 = vld [vmem:[%s291 + $0x38] sm:$0xff]
        %v969 = vadd.f32 %v953, %v961
        %v970 = vadd.f32 %v954, %v962
        %v971 = vadd.f32 %v955, %v963
        %v972 = vadd.f32 %v956, %v964
        %v973 = vadd.f32 %v957, %v965
        %v974 = vadd.f32 %v958, %v966
        %v975 = vadd.f32 %v959, %v967
        %v976 = vadd.f32 %v960, %v968
        %977 = vrot.lane.b32.xlu0 %v969, 17
        %v978 = vpop.permute.xlu0 %977
        %979 = vrot.lane.b32.xlu0 %v973, 17
        %v980 = vpop.permute.xlu0 %979
        %981 = vrot.lane.b32.xlu0 %v970, 17
        %v982 = vpop.permute.xlu0 %981
        %983 = vrot.lane.b32.xlu0 %v974, 17
        %v984 = vpop.permute.xlu0 %983
        %985 = vrot.lane.b32.xlu0 %v971, 17
        %v986 = vpop.permute.xlu0 %985
        %987 = vrot.lane.b32.xlu0 %v975, 17
        %v988 = vpop.permute.xlu0 %987
        %989 = vrot.lane.b32.xlu0 %v972, 17
        %v990 = vpop.permute.xlu0 %989
        %991 = vrot.lane.b32.xlu0 %v976, 17
        %v992 = vpop.permute.xlu0 %991
        %v993 = vsel %vm369, %v986, %v990
        %v994 = vsel %vm369, %v988, %v992
        %v995 = vsel %vm369, %v982, %v986
        %v996 = vsel %vm369, %v984, %v988
        %v997 = vsel %vm369, %v978, %v982
        %v998 = vsel %vm369, %v980, %v984
        %v999 = vsel %vm369, %v990, %v978
        %v1000 = vsel %vm369, %v992, %v980
        %v1001 = vmul.f32 %v999, %v377
        %v1002 = vmul.f32 %v997, %v381
        %v1003 = vmul.f32 %v995, %v385
        %v1004 = vmul.f32 %v993, %v389
        %v1005 = vmul.f32 %v1000, %v377
        %v1006 = vmul.f32 %v998, %v381
        %v1007 = vmul.f32 %v996, %v385
        %v1008 = vmul.f32 %v994, %v389
        %1009 = vrot.lane.b32.xlu0 %v969, 16
        %v1010 = vpop.permute.xlu0 %1009
        %1011 = vrot.lane.b32.xlu0 %v973, 16
        %v1012 = vpop.permute.xlu0 %1011
        %1013 = vrot.lane.b32.xlu0 %v970, 16
        %v1014 = vpop.permute.xlu0 %1013
        %1015 = vrot.lane.b32.xlu0 %v974, 16
        %v1016 = vpop.permute.xlu0 %1015
        %1017 = vrot.lane.b32.xlu0 %v971, 16
        %v1018 = vpop.permute.xlu0 %1017
        %1019 = vrot.lane.b32.xlu0 %v975, 16
        %v1020 = vpop.permute.xlu0 %1019
        %1021 = vrot.lane.b32.xlu0 %v972, 16
        %v1022 = vpop.permute.xlu0 %1021
        %1023 = vrot.lane.b32.xlu0 %v976, 16
        %v1024 = vpop.permute.xlu0 %1023
        %v1025 = vsel %vm406, %v1018, %v1022
        %v1026 = vsel %vm406, %v1020, %v1024
        %v1027 = vsel %vm406, %v1014, %v1018
        %v1028 = vsel %vm406, %v1016, %v1020
        %v1029 = vsel %vm406, %v1010, %v1014
        %v1030 = vsel %vm406, %v1012, %v1016
        %v1031 = vsel %vm406, %v1022, %v1010
        %v1032 = vsel %vm406, %v1024, %v1012
        %v1033 = vmul.f32 %v1031, %v414
        %v1034 = vmul.f32 %v1029, %v418
        %v1035 = vmul.f32 %v1027, %v422
        %v1036 = vmul.f32 %v1025, %v426
        %v1037 = vmul.f32 %v1032, %v414
        %v1038 = vmul.f32 %v1030, %v418
        %v1039 = vmul.f32 %v1028, %v422
        %v1040 = vmul.f32 %v1026, %v426
        %1041 = vrot.lane.b32.xlu0 %v969, 15
        %v1042 = vpop.permute.xlu0 %1041
        %1043 = vrot.lane.b32.xlu0 %v973, 15
        %v1044 = vpop.permute.xlu0 %1043
        %1045 = vrot.lane.b32.xlu0 %v970, 15
        %v1046 = vpop.permute.xlu0 %1045
        %1047 = vrot.lane.b32.xlu0 %v974, 15
        %v1048 = vpop.permute.xlu0 %1047
        %1049 = vrot.lane.b32.xlu0 %v971, 15
        %v1050 = vpop.permute.xlu0 %1049
        %1051 = vrot.lane.b32.xlu0 %v975, 15
        %v1052 = vpop.permute.xlu0 %1051
        %1053 = vrot.lane.b32.xlu0 %v972, 15
        %v1054 = vpop.permute.xlu0 %1053
        %1055 = vrot.lane.b32.xlu0 %v976, 15
        %v1056 = vpop.permute.xlu0 %1055
        %v1057 = vsel %vm455, %v1050, %v1054
        %v1058 = vsel %vm455, %v1052, %v1056
        %v1059 = vsel %vm455, %v1046, %v1050
        %v1060 = vsel %vm455, %v1048, %v1052
        %v1061 = vsel %vm455, %v1042, %v1046
        %v1062 = vsel %vm455, %v1044, %v1048
        %v1063 = vsel %vm455, %v1054, %v1042
        %v1064 = vsel %vm455, %v1056, %v1044
        %v1065 = vmul.f32 %v1063, %v463
        %v1066 = vmul.f32 %v1061, %v467
        %v1067 = vmul.f32 %v1059, %v471
        %v1068 = vmul.f32 %v1057, %v475
        %v1069 = vmul.f32 %v1064, %v463
        %v1070 = vmul.f32 %v1062, %v467
        %v1071 = vmul.f32 %v1060, %v471
        %v1072 = vmul.f32 %v1058, %v475
        %1073 = vrot.lane.b32.xlu0 %v969, 1
        %v1074 = vpop.permute.xlu0 %1073
        %1075 = vrot.lane.b32.xlu0 %v973, 1
        %v1076 = vpop.permute.xlu0 %1075
        %1077 = vrot.lane.b32.xlu0 %v970, 1
        %v1078 = vpop.permute.xlu0 %1077
        %1079 = vrot.lane.b32.xlu0 %v974, 1
        %v1080 = vpop.permute.xlu0 %1079
        %1081 = vrot.lane.b32.xlu0 %v971, 1
        %v1082 = vpop.permute.xlu0 %1081
        %1083 = vrot.lane.b32.xlu0 %v975, 1
        %v1084 = vpop.permute.xlu0 %1083
        %1085 = vrot.lane.b32.xlu0 %v972, 1
        %v1086 = vpop.permute.xlu0 %1085
        %1087 = vrot.lane.b32.xlu0 %v976, 1
        %v1088 = vpop.permute.xlu0 %1087
        %v1089 = vsel %vm508, %v1082, %v1086
        %v1090 = vsel %vm508, %v1084, %v1088
        %v1091 = vsel %vm508, %v1078, %v1082
        %v1092 = vsel %vm508, %v1080, %v1084
        %v1093 = vsel %vm508, %v1074, %v1078
        %v1094 = vsel %vm508, %v1076, %v1080
        %v1095 = vsel %vm508, %v1086, %v1074
        %v1096 = vsel %vm508, %v1088, %v1076
        %v1097 = vmul.f32 %v1095, %v516
        %v1098 = vmul.f32 %v1093, %v520
        %v1099 = vmul.f32 %v1091, %v524
        %v1100 = vmul.f32 %v1089, %v528
        %v1101 = vmul.f32 %v1096, %v516
        %v1102 = vmul.f32 %v1094, %v520
        %v1103 = vmul.f32 %v1092, %v524
        %v1104 = vmul.f32 %v1090, %v528
        %1105 = vrot.lane.b32.xlu0 %v969, 127
        %v1106 = vpop.permute.xlu0 %1105
        %1107 = vrot.lane.b32.xlu0 %v973, 127
        %v1108 = vpop.permute.xlu0 %1107
        %1109 = vrot.lane.b32.xlu0 %v970, 127
        %v1110 = vpop.permute.xlu0 %1109
        %1111 = vrot.lane.b32.xlu0 %v974, 127
        %v1112 = vpop.permute.xlu0 %1111
        %1113 = vrot.lane.b32.xlu0 %v971, 127
        %v1114 = vpop.permute.xlu0 %1113
        %1115 = vrot.lane.b32.xlu0 %v975, 127
        %v1116 = vpop.permute.xlu0 %1115
        %1117 = vrot.lane.b32.xlu0 %v972, 127
        %v1118 = vpop.permute.xlu0 %1117
        %1119 = vrot.lane.b32.xlu0 %v976, 127
        %v1120 = vpop.permute.xlu0 %1119
        %v1121 = vsel %vm569, %v1114, %v1118
        %v1122 = vsel %vm569, %v1116, %v1120
        %v1123 = vsel %vm569, %v1110, %v1114
        %v1124 = vsel %vm569, %v1112, %v1116
        %v1125 = vsel %vm569, %v1106, %v1110
        %v1126 = vsel %vm569, %v1108, %v1112
        %v1127 = vsel %vm569, %v1118, %v1106
        %v1128 = vsel %vm569, %v1120, %v1108
        %v1129 = vmul.f32 %v1125, %v577
        %v1130 = vmul.f32 %v1123, %v581
        %v1131 = vmul.f32 %v1121, %v585
        %v1132 = vmul.f32 %v1127, %v589
        %v1133 = vmul.f32 %v1126, %v577
        %v1134 = vmul.f32 %v1124, %v581
        %v1135 = vmul.f32 %v1122, %v585
        %v1136 = vmul.f32 %v1128, %v589
        %1137 = vrot.lane.b32.xlu0 %v969, 113
        %v1138 = vpop.permute.xlu0 %1137
        %1139 = vrot.lane.b32.xlu0 %v973, 113
        %v1140 = vpop.permute.xlu0 %1139
        %1141 = vrot.lane.b32.xlu0 %v970, 113
        %v1142 = vpop.permute.xlu0 %1141
        %1143 = vrot.lane.b32.xlu0 %v974, 113
        %v1144 = vpop.permute.xlu0 %1143
        %1145 = vrot.lane.b32.xlu0 %v971, 113
        %v1146 = vpop.permute.xlu0 %1145
        %1147 = vrot.lane.b32.xlu0 %v975, 113
        %v1148 = vpop.permute.xlu0 %1147
        %1149 = vrot.lane.b32.xlu0 %v972, 113
        %v1150 = vpop.permute.xlu0 %1149
        %1151 = vrot.lane.b32.xlu0 %v976, 113
        %v1152 = vpop.permute.xlu0 %1151
        %v1153 = vsel %vm622, %v1146, %v1150
        %v1154 = vsel %vm622, %v1148, %v1152
        %v1155 = vsel %vm622, %v1142, %v1146
        %v1156 = vsel %vm622, %v1144, %v1148
        %v1157 = vsel %vm622, %v1138, %v1142
        %v1158 = vsel %vm622, %v1140, %v1144
        %v1159 = vsel %vm622, %v1150, %v1138
        %v1160 = vsel %vm622, %v1152, %v1140
        %v1161 = vmul.f32 %v1157, %v630
        %v1162 = vmul.f32 %v1155, %v634
        %v1163 = vmul.f32 %v1153, %v638
        %v1164 = vmul.f32 %v1159, %v642
        %v1165 = vmul.f32 %v1158, %v630
        %v1166 = vmul.f32 %v1156, %v634
        %v1167 = vmul.f32 %v1154, %v638
        %v1168 = vmul.f32 %v1160, %v642
        %1169 = vrot.lane.b32.xlu0 %v969, 112
        %v1170 = vpop.permute.xlu0 %1169
        %1171 = vrot.lane.b32.xlu0 %v973, 112
        %v1172 = vpop.permute.xlu0 %1171
        %1173 = vrot.lane.b32.xlu0 %v970, 112
        %v1174 = vpop.permute.xlu0 %1173
        %1175 = vrot.lane.b32.xlu0 %v974, 112
        %v1176 = vpop.permute.xlu0 %1175
        %1177 = vrot.lane.b32.xlu0 %v971, 112
        %v1178 = vpop.permute.xlu0 %1177
        %1179 = vrot.lane.b32.xlu0 %v975, 112
        %v1180 = vpop.permute.xlu0 %1179
        %1181 = vrot.lane.b32.xlu0 %v972, 112
        %v1182 = vpop.permute.xlu0 %1181
        %1183 = vrot.lane.b32.xlu0 %v976, 112
        %v1184 = vpop.permute.xlu0 %1183
        %v1185 = vsel %vm671, %v1178, %v1182
        %v1186 = vsel %vm671, %v1180, %v1184
        %v1187 = vsel %vm671, %v1174, %v1178
        %v1188 = vsel %vm671, %v1176, %v1180
        %v1189 = vsel %vm671, %v1170, %v1174
        %v1190 = vsel %vm671, %v1172, %v1176
        %v1191 = vsel %vm671, %v1182, %v1170
        %v1192 = vsel %vm671, %v1184, %v1172
        %v1193 = vmul.f32 %v1189, %v679
        %v1194 = vmul.f32 %v1187, %v683
        %v1195 = vmul.f32 %v1185, %v687
        %v1196 = vmul.f32 %v1191, %v691
        %v1197 = vmul.f32 %v1190, %v679
        %v1198 = vmul.f32 %v1188, %v683
        %v1199 = vmul.f32 %v1186, %v687
        %v1200 = vmul.f32 %v1192, %v691
        %1201 = vrot.lane.b32.xlu0 %v969, 111
        %v1202 = vpop.permute.xlu0 %1201
        %1203 = vrot.lane.b32.xlu0 %v973, 111
        %v1204 = vpop.permute.xlu0 %1203
        %1205 = vrot.lane.b32.xlu0 %v970, 111
        %v1206 = vpop.permute.xlu0 %1205
        %1207 = vrot.lane.b32.xlu0 %v974, 111
        %v1208 = vpop.permute.xlu0 %1207
        %1209 = vrot.lane.b32.xlu0 %v971, 111
        %v1210 = vpop.permute.xlu0 %1209
        %1211 = vrot.lane.b32.xlu0 %v975, 111
        %v1212 = vpop.permute.xlu0 %1211
        %1213 = vrot.lane.b32.xlu0 %v972, 111
        %v1214 = vpop.permute.xlu0 %1213
        %1215 = vrot.lane.b32.xlu0 %v976, 111
        %v1216 = vpop.permute.xlu0 %1215
        %v1217 = vsel %vm720, %v1210, %v1214
        %v1218 = vsel %vm720, %v1212, %v1216
        %v1219 = vsel %vm720, %v1206, %v1210
        %v1220 = vsel %vm720, %v1208, %v1212
        %v1221 = vsel %vm720, %v1202, %v1206
        %v1222 = vsel %vm720, %v1204, %v1208
        %v1223 = vsel %vm720, %v1214, %v1202
        %v1224 = vsel %vm720, %v1216, %v1204
        %v1225 = vmul.f32 %v1221, %v728
        %v1226 = vmul.f32 %v1219, %v732
        %v1227 = vmul.f32 %v1217, %v736
        %v1228 = vmul.f32 %v1223, %v740
        %v1229 = vmul.f32 %v1222, %v728
        %v1230 = vmul.f32 %v1220, %v732
        %v1231 = vmul.f32 %v1218, %v736
        %v1232 = vmul.f32 %v1224, %v740
        %v1233 = vld [vmem:[%s5] sm:$0x77]
        %v1234 = vld [vmem:[%s6] sm:$0x7]
        %1236 = vset.pattern.permute.xlu0 0
        %1237 = vperm.xlu0 %1236, %v1234
        %v1238 = vpop.permute.xlu0 %1237
        %v1241 = vcombine.high %v1233, %v1233
        %vm1242 = vcmask 130048
        %v1243 = vsel %vm1242, %v1241, 0
        %1245 = vmatprep.subr.mxu0 %v1198
        %1246 = vmatpush1.msra.mxu0 %v1197
        %1247 = vmatprep.subr.mxu0 %v1194
        %1248 = vmatpush1.msra.mxu0 %v1193
        %1249 = vmatprep.subr.mxu0 %v1166
        %1250 = vmatpush1.msra.mxu0 %v1165
        %1251 = vmatprep.subr.mxu0 %v1162
        %1252 = vmatpush1.msra.mxu0 %v1161
        %1253 = vmatprep.subr.mxu0 %v1134
        %1254 = vmatpush1.msra.mxu0 %v1133
        %1255 = vmatprep.subr.mxu0 %v1130
        %1256 = vmatpush1.msra.mxu0 %v1129
        %1257 = vmatprep.subr.mxu0 %v974
        %1258 = vmatpush1.msra.mxu0 %v973
        %1259 = vmatprep.subr.mxu0 %v970
        %1260 = vmatpush1.msra.mxu0 %v969
        %1261 = vmatprep.subr.mxu0 %v1102
        %1262 = vmatpush1.msra.mxu0 %v1101
        %1263 = vmatprep.subr.mxu0 %v1098
        %1264 = vmatpush1.msra.mxu0 %v1097
        %1265 = vmatprep.subr.mxu0 %v1070
        %1266 = vmatpush1.msra.mxu0 %v1069
        %1267 = vmatprep.subr.mxu0 %v1066
        %1268 = vmatpush1.msra.mxu0 %v1065
        %1269 = vmatprep.subr.mxu0 %v1038
        %1270 = vmatpush1.msra.mxu0 %v1037
        %1271 = vmatprep.subr.mxu0 %v1034
        %1272 = vmatpush1.msra.mxu0 %v1033
        %1273 = vmatprep.subr.mxu0 %v1006
        %1274 = vmatpush1.msra.mxu0 %v1005
        %1275 = vmatprep.subr.mxu0 %v1002
        %1276 = vmatpush1.msra.mxu0 %v1001
        %1277 = vmatprep.subr.mxu0 0.0
        %1278 = vmatpush2.msra.mxu0 0.0
        %1279 = vmatprep.subr.mxu0 0.0
        %1280 = vmatpush2.msra.mxu0 0.0
        %1281 = vmatprep.subr.mxu0 0.0
        %1282 = vmatpush2.msra.mxu0 0.0
        %1283 = vmatprep.subr.mxu0 0.0
        %1284 = vmatpush2.msra.mxu0 0.0
        %1285 = vmatprep.subr.mxu0 0.0
        %1286 = vmatpush2.msra.mxu0 0.0
        %1287 = vmatprep.subr.mxu0 0.0
        %1288 = vmatpush2.msra.mxu0 0.0
        %1289 = vmatprep.subr.mxu0 0.0
        %1290 = vmatpush2.msra.mxu0 0.0
        %1291 = vmatprep.subr.mxu0 0.0
        %1292 = vmatpush2.msra.mxu0 0.0
        %1293 = vmatprep.subr.mxu0 0.0
        %1294 = vmatpush2.msra.mxu0 0.0
        %1295 = vmatprep.subr.mxu0 0.0
        %1296 = vmatpush2.msra.mxu0 0.0
        %1297 = vmatprep.subr.mxu0 0.0
        %1298 = vmatpush2.msra.mxu0 0.0
        %1299 = vmatprep.subr.mxu0 0.0
        %1300 = vmatpush2.msra.mxu0 0.0
        %1301 = vmatprep.subr.mxu0 0.0
        %1302 = vmatpush2.msra.mxu0 0.0
        %1303 = vmatprep.subr.mxu0 0.0
        %1304 = vmatpush2.msra.mxu0 0.0
        %1305 = vmatprep.subr.mxu0 %v1230
        %1306 = vmatpush2.msra.mxu0 %v1229
        %1307 = vmatprep.subr.mxu0 %v1226
        %1308 = vmatpush2.msra.mxu0 %v1225
        %1309 = vmatprep.mubr.f32.mxu0 %v1243
        %1310 = vmatmul.mubr.f32.gmra.mxu0 %v1233
        %v1311 = vpop.f32.mrf.mxu0
        %v1312 = vadd.f32 %v1238, %v1311
        %v1313 = vpop.f32.mrf.mxu0
        %v1314 = vadd.f32 %v1238, %v1313
        %1315 = vdwg.mxu0
        %1316 = vmatprep.subr.mxu0 %v1200
        %1317 = vmatpush1.msra.mxu0 %v1199
        %1318 = vmatprep.subr.mxu0 %v1196
        %1319 = vmatpush1.msra.mxu0 %v1195
        %1320 = vmatprep.subr.mxu0 %v1168
        %1321 = vmatpush1.msra.mxu0 %v1167
        %1322 = vmatprep.subr.mxu0 %v1164
        %1323 = vmatpush1.msra.mxu0 %v1163
        %1324 = vmatprep.subr.mxu0 %v1136
        %1325 = vmatpush1.msra.mxu0 %v1135
        %1326 = vmatprep.subr.mxu0 %v1132
        %1327 = vmatpush1.msra.mxu0 %v1131
        %1328 = vmatprep.subr.mxu0 %v976
        %1329 = vmatpush1.msra.mxu0 %v975
        %1330 = vmatprep.subr.mxu0 %v972
        %1331 = vmatpush1.msra.mxu0 %v971
        %1332 = vmatprep.subr.mxu0 %v1104
        %1333 = vmatpush1.msra.mxu0 %v1103
        %1334 = vmatprep.subr.mxu0 %v1100
        %1335 = vmatpush1.msra.mxu0 %v1099
        %1336 = vmatprep.subr.mxu0 %v1072
        %1337 = vmatpush1.msra.mxu0 %v1071
        %1338 = vmatprep.subr.mxu0 %v1068
        %1339 = vmatpush1.msra.mxu0 %v1067
        %1340 = vmatprep.subr.mxu0 %v1040
        %1341 = vmatpush1.msra.mxu0 %v1039
        %1342 = vmatprep.subr.mxu0 %v1036
        %1343 = vmatpush1.msra.mxu0 %v1035
        %1344 = vmatprep.subr.mxu0 %v1008
        %1345 = vmatpush1.msra.mxu0 %v1007
        %1346 = vmatprep.subr.mxu0 %v1004
        %1347 = vmatpush1.msra.mxu0 %v1003
        %1348 = vmatprep.subr.mxu0 0.0
        %1349 = vmatpush2.msra.mxu0 0.0
        %1350 = vmatprep.subr.mxu0 0.0
        %1351 = vmatpush2.msra.mxu0 0.0
        %1352 = vmatprep.subr.mxu0 0.0
        %1353 = vmatpush2.msra.mxu0 0.0
        %1354 = vmatprep.subr.mxu0 0.0
        %1355 = vmatpush2.msra.mxu0 0.0
        %1356 = vmatprep.subr.mxu0 0.0
        %1357 = vmatpush2.msra.mxu0 0.0
        %1358 = vmatprep.subr.mxu0 0.0
        %1359 = vmatpush2.msra.mxu0 0.0
        %1360 = vmatprep.subr.mxu0 0.0
        %1361 = vmatpush2.msra.mxu0 0.0
        %1362 = vmatprep.subr.mxu0 0.0
        %1363 = vmatpush2.msra.mxu0 0.0
        %1364 = vmatprep.subr.mxu0 0.0
        %1365 = vmatpush2.msra.mxu0 0.0
        %1366 = vmatprep.subr.mxu0 0.0
        %1367 = vmatpush2.msra.mxu0 0.0
        %1368 = vmatprep.subr.mxu0 0.0
        %1369 = vmatpush2.msra.mxu0 0.0
        %1370 = vmatprep.subr.mxu0 0.0
        %1371 = vmatpush2.msra.mxu0 0.0
        %1372 = vmatprep.subr.mxu0 0.0
        %1373 = vmatpush2.msra.mxu0 0.0
        %1374 = vmatprep.subr.mxu0 0.0
        %1375 = vmatpush2.msra.mxu0 0.0
        %1376 = vmatprep.subr.mxu0 %v1232
        %1377 = vmatpush2.msra.mxu0 %v1231
        %1378 = vmatprep.subr.mxu0 %v1228
        %1379 = vmatpush2.msra.mxu0 %v1227
        %1380 = vmatprep.mubr.f32.mxu0 %v1243
        %1381 = vmatmul.mubr.f32.gmra.mxu0 %v1233
        %v1382 = vpop.f32.mrf.mxu0
        %v1383 = vadd.f32 %v1238, %v1382
        %v1384 = vpop.f32.mrf.mxu0
        %v1385 = vadd.f32 %v1238, %v1384
        %1386 = vdwg.mxu0
        %v1389 = vcombine.low %v1312, %v1314
        %1391 = vst [vmem:[%s340] sm:$0x77] %v1389
        %v1394 = vcombine.low %v1383, %v1385
        %s1396 = scalar_lea.vmem %s340, 8
        %1397 = vst [vmem:[%s1396] sm:$0x77] %v1394
        %s1398 = smul.u32 2, %s18
        %p1399 = scmp.lt.s32.totalorder %s1398, 3
        %s1400 = scalar_select %p1399, %s1398, 3
        %s1401 = smul.addr %s1400, 2
        %s1402 = smul.addr %s1401, 4
        %s1403 = scalar_lea.vmem %s7, %s1402
        // Predicated region
        $region72: #{model_forward.1} parent=66 // pred_check
          %p1404 = pneg %p193
        $region73: #{model_forward.1} parent=66 // pred_check_branch
          %1406 = sbr.rel (%p1404) target = $region75
        $region74: #{model_forward.1} parent=66 // pred_region
          %s1407 = smul.u32 2, %s18
        $region75: #{model_forward.1} parent=66 // pred_fallthru
          _
      $region67: #{model_forward.1} parent=5 // pred_fallthru
        _
      %p1408 = scmp.le.s32.totalorder 2, %s13
      // Predicated region
      $region76: #{model_forward.1} parent=5 // pred_check
        %p1409 = pneg %p1408
      $region77: #{model_forward.1} parent=5 // pred_check_branch
        %1411 = sbr.rel (%p1409) target = $region79
      $region78: #{model_forward.1} parent=5 // pred_region
        %s1412 = ssub.s32 %s13, 2
        // Predicated region
        $region80: #{model_forward.1} parent=78 // pred_check
          %p1413 = pneg %p199
        $region81: #{model_forward.1} parent=78 // pred_check_branch
          %1415 = sbr.rel (%p1413) target = $region83
        $region82: #{model_forward.1} parent=78 // pred_region
          %s1416 = smul.u32 2, %s19
          %p1417 = scmp.lt.s32.totalorder %s1416, 3
          %s1418 = scalar_select %p1417, %s1416, 3
          %s1419 = smul.addr %s1418, 2
          %s1420 = smul.addr %s1419, 4
          %s1421 = scalar_lea.vmem %s7, %s1420
        $region83: #{model_forward.1} parent=78 // pred_fallthru
          _
      $region79: #{model_forward.1} parent=5 // pred_fallthru
        _
    $region6: #{model_forward.1} parent=1 // loop_footer
      %s17 = sadd.s32 1, %s13
    $region7: #{model_forward.1} parent=1 // loop_footer_branch
      %12 = sbr.rel target = $region3
    $region8: #{model_forward.1} parent=1 // loop_exit
      _

</llo_original>
